<compile_context>
chip_gen: v5e
topology: v5e:2x2
jax: 0.10.0
libtpu: 0.0.40
codegen_flags: <defaults>
</compile_context>

<pallas_src>
import functools

import jax
import jax.numpy as jnp
from jax.experimental import pallas as pl
from jax.experimental.pallas import tpu as pltpu


def _fused_lstm_kernel(*refs, num_layers, seq_len, batch_size, hidden_size):
    """All layers + all timesteps in one kernel invocation (no grid).

    refs layout:
      inputs : x (T*B, D) time-major flattened,
               [w_ih_t (Din,4H), w_hh_t (H,4H), b (1,4H)] * num_layers  (gate order i,f,o,g),
               h0 (L,B,H), c0 (L,B,H)
      outputs: y (T*B, H), h_n (L,B,H), c_n (L,B,H)
      scratch: y_sc (T*B, H) f32, gproj_sc (T*B, 4H) f32
    """
    L, T, B, H = num_layers, seq_len, batch_size, hidden_size
    n_w = 3 * L
    x_ref = refs[0]
    w_refs = refs[1:1 + n_w]
    h0_ref = refs[1 + n_w]
    c0_ref = refs[2 + n_w]
    y_ref = refs[3 + n_w]
    hT_ref = refs[4 + n_w]
    cT_ref = refs[5 + n_w]
    y_sc = refs[6 + n_w]
    gproj_sc = refs[7 + n_w]

    for l in range(L):  # unrolled at trace time (L is small / static)
        # Hoisted weight / bias loads (read once per layer, not per timestep).
        w_ih = w_refs[3 * l + 0][...]                       # (Din, 4H), native dtype
        w_hh = w_refs[3 * l + 1][...]                       # (H, 4H),  native dtype
        b = w_refs[3 * l + 2][...].astype(jnp.float32)      # (1, 4H)

        # Layer input: 2D already, no tile-crossing reshape.
        xin2d = x_ref[...] if l == 0 else y_sc[...]

        # Time-parallel projection for all T steps in ONE matmul, bias fused here.
        # LHS cast to weight dtype (single-pass MXU for bf16 weights), f32 accumulation.
        proj = jnp.dot(xin2d.astype(w_ih.dtype), w_ih,
                       preferred_element_type=jnp.float32) + b
        gproj_sc[...] = proj

        h0 = h0_ref[l].astype(jnp.float32)
        c0 = c0_ref[l].astype(jnp.float32)

        def step(t, carry):
            h, c = carry
            row = t * B
            # Serial critical path: only the (B,H) @ (H,4H) matmul + activations.
            gates = gproj_sc[pl.ds(row, B), :] + jnp.dot(
                h.astype(w_hh.dtype), w_hh, preferred_element_type=jnp.float32)
            # Gate order is [i, f, o | g]: sigmoid only on the first 3H columns,
            # tanh only on the last H columns (halves EUP work vs. full-width passes).
            sig = jax.nn.sigmoid(gates[:, :3 * H])
            g_g = jnp.tanh(gates[:, 3 * H:])
            i_g = sig[:, 0 * H:1 * H]
            f_g = sig[:, 1 * H:2 * H]
            o_g = sig[:, 2 * H:3 * H]
            c_new = f_g * c + i_g * g_g
            h_new = o_g * jnp.tanh(c_new)
            y_sc[pl.ds(row, B), :] = h_new      # stays in VMEM; flushed once at the end
            return (h_new, c_new)

        # Bounded unroll: LLO visibility without exploding code size / vreg pressure.
        h_fin, c_fin = jax.lax.fori_loop(0, T, step, (h0, c0), unroll=min(T, 8))

        hT_ref[l] = h_fin.astype(hT_ref.dtype)
        cT_ref[l] = c_fin.astype(cT_ref.dtype)

    # Single full-block store of the last layer's sequence output.
    y_ref[...] = y_sc[...].astype(y_ref.dtype)


def _pack_layer(w_ih, w_hh, b_ih, b_hh, H):
    """Pack PyTorch-layout LSTM weights for the kernel.

    PyTorch gate order along the 4H axis is [i, f, g, o]; the kernel uses [i, f, o, g]
    so the sigmoid-activated gates occupy the contiguous first 3H columns.
    Weights are transposed to (Din, 4H) / (H, 4H) so the kernel does plain x @ W.
    """
    perm = jnp.concatenate([
        jnp.arange(0 * H, 1 * H),   # i
        jnp.arange(1 * H, 2 * H),   # f
        jnp.arange(3 * H, 4 * H),   # o
        jnp.arange(2 * H, 3 * H),   # g
    ])
    return {
        "w_ih_t": w_ih[perm].T,                          # (Din, 4H)
        "w_hh_t": w_hh[perm].T,                          # (H, 4H)
        "b": (b_ih + b_hh)[perm].reshape(1, 4 * H),      # (1, 4H)
    }


def stateful_lstm_forward(x_bt, hidden, packed_params):
    """Semantics of StatefulLSTM.forward.

    x_bt          : (B, T, num_features)  (batch_first, like the PyTorch module)
    hidden        : (h0, c0), each (num_layers, B, H)
    packed_params : list of per-layer dicts from _pack_layer
    Returns (y, (h_n, c_n)) with y: (B, T, H), h_n/c_n: (num_layers, B, H).
    """
    h0_all, c0_all = hidden
    B, T, D = x_bt.shape
    L, _, H = h0_all.shape

    # TODO(synk): accept time-major I/O to drop this wrapper-side HBM transpose.
    x_flat = jnp.transpose(x_bt, (1, 0, 2)).reshape(T * B, D)   # time-major, 2D

    flat_w = []
    for p in packed_params:
        flat_w += [p["w_ih_t"], p["w_hh_t"], p["b"]]
    n_in = 1 + len(flat_w) + 2

    # Explicit scoped-VMEM budget (v5e default is only 16 MiB); capped at 64 MiB (v7x).
    itemsize = jnp.dtype(x_bt.dtype).itemsize
    needed = (
        T * B * D * itemsize
        + sum(int(w.size) * w.dtype.itemsize for w in flat_w)
        + 4 * L * B * H * h0_all.dtype.itemsize
        + T * B * H * itemsize
        + T * B * 5 * H * 4          # y_sc + gproj_sc scratches (f32)
    )
    vmem_limit = int(min(64 * 1024 * 1024,
                         max(16 * 1024 * 1024, 2 * needed + (4 << 20))))

    kernel = functools.partial(_fused_lstm_kernel, num_layers=L, seq_len=T,
                               batch_size=B, hidden_size=H)

    vmem_spec = pl.BlockSpec(memory_space=pltpu.MemorySpace.VMEM)
    y_flat, h_n, c_n = pl.pallas_call(
        kernel,
        out_shape=(
            jax.ShapeDtypeStruct((T * B, H), x_bt.dtype),
            jax.ShapeDtypeStruct((L, B, H), h0_all.dtype),
            jax.ShapeDtypeStruct((L, B, H), c0_all.dtype),
        ),
        in_specs=[vmem_spec] * n_in,
        out_specs=(vmem_spec, vmem_spec, vmem_spec),
        scratch_shapes=[
            pltpu.VMEM((T * B, H), jnp.float32),        # per-layer hidden outputs (carry)
            pltpu.VMEM((T * B, 4 * H), jnp.float32),    # precomputed input projections
        ],
        compiler_params=pltpu.CompilerParams(vmem_limit_bytes=vmem_limit),
    )(x_flat, *flat_w, h0_all, c0_all)

    y_bt = jnp.transpose(y_flat.reshape(T, B, H), (1, 0, 2))    # back to (B, T, H)
    return y_bt, (h_n, c_n)


def _reference_lstm(x_bt, hidden, raw_params):
    """Pure-JAX reference using PyTorch nn.LSTM layouts / equations for validation."""
    h0_all, c0_all = hidden
    H = h0_all.shape[-1]
    x = jnp.transpose(x_bt, (1, 0, 2))                   # (T, B, D)
    h_fin, c_fin = [], []
    for layer, p in enumerate(raw_params):
        def step(carry, xt, p=p):
            h, c = carry
            gates = xt @ p["w_ih"].T + h @ p["w_hh"].T + p["b_ih"] + p["b_hh"]
            i = jax.nn.sigmoid(gates[:, 0 * H:1 * H])
            f = jax.nn.sigmoid(gates[:, 1 * H:2 * H])
            g = jnp.tanh(gates[:, 2 * H:3 * H])
            o = jax.nn.sigmoid(gates[:, 3 * H:4 * H])
            c_new = f * c + i * g
            h_new = o * jnp.tanh(c_new)
            return (h_new, c_new), h_new

        (hT, cT), ys = jax.lax.scan(step, (h0_all[layer], c0_all[layer]), x)
        h_fin.append(hT)
        c_fin.append(cT)
        x = ys
    return jnp.transpose(x, (1, 0, 2)), (jnp.stack(h_fin, 0), jnp.stack(c_fin, 0))


def init_lstm_params(key, num_features, hidden_size, num_layers, dtype=jnp.float32):
    """PyTorch-style nn.LSTM params: uniform(-1/sqrt(H), 1/sqrt(H)), gate order [i,f,g,o]."""
    params = []
    bound = 1.0 / float(hidden_size) ** 0.5
    for layer in range(num_layers):
        in_dim = num_features if layer == 0 else hidden_size
        key, k1, k2, k3, k4 = jax.random.split(key, 5)
        params.append({
            "w_ih": jax.random.uniform(k1, (4 * hidden_size, in_dim), dtype, -bound, bound),
            "w_hh": jax.random.uniform(k2, (4 * hidden_size, hidden_size), dtype, -bound, bound),
            "b_ih": jax.random.uniform(k3, (4 * hidden_size,), dtype, -bound, bound),
            "b_hh": jax.random.uniform(k4, (4 * hidden_size,), dtype, -bound, bound),
        })
    return params


if __name__ == "__main__":
    # Small shapes consistent with the module's forward.
    num_features = 4
    num_memory_nodes = 32     # hidden size
    num_stacked_LSTMs = 2
    batch_size = 2
    seq_len = 8

    key = jax.random.PRNGKey(0)
    key, kx = jax.random.split(key)
    x = jax.random.normal(kx, (batch_size, seq_len, num_features), jnp.float32)

    # StatefulLSTM.__init__ / reset_states: zero-initialized (h, c).
    h0 = jnp.zeros((num_stacked_LSTMs, batch_size, num_memory_nodes), jnp.float32)
    c0 = jnp.zeros_like(h0)

    raw_params = init_lstm_params(key, num_features, num_memory_nodes, num_stacked_LSTMs)
    packed_params = [
        _pack_layer(p["w_ih"], p["w_hh"], p["b_ih"], p["b_hh"], num_memory_nodes)
        for p in raw_params
    ]

    y, (h_n, c_n) = stateful_lstm_forward(x, (h0, c0), packed_params)
    jax.block_until_ready((y, h_n, c_n))

    # Validate against pure-JAX reference of the nn.LSTM equations (all f32).
    y_ref, (h_ref, c_ref) = _reference_lstm(x, (h0, c0), raw_params)
    assert y.shape == (batch_size, seq_len, num_memory_nodes)
    assert h_n.shape == (num_stacked_LSTMs, batch_size, num_memory_nodes)
    assert c_n.shape == (num_stacked_LSTMs, batch_size, num_memory_nodes)
    assert jnp.allclose(y, y_ref, atol=1e-5, rtol=1e-5)
    assert jnp.allclose(h_n, h_ref, atol=1e-5, rtol=1e-5)
    assert jnp.allclose(c_n, c_ref, atol=1e-5, rtol=1e-5)

    print("KERNEL_OK")
</pallas_src>

<mosaic_0001>
module attributes {stable_mosaic.version = 11 : i64} {
  func.func @_fused_lstm_kernel(%arg0: memref<16x4xf32, #tpu.memory_space<vmem>>, %arg1: memref<4x128xf32, #tpu.memory_space<vmem>>, %arg2: memref<32x128xf32, #tpu.memory_space<vmem>>, %arg3: memref<1x128xf32, #tpu.memory_space<vmem>>, %arg4: memref<32x128xf32, #tpu.memory_space<vmem>>, %arg5: memref<32x128xf32, #tpu.memory_space<vmem>>, %arg6: memref<1x128xf32, #tpu.memory_space<vmem>>, %arg7: memref<2x2x32xf32, #tpu.memory_space<vmem>>, %arg8: memref<2x2x32xf32, #tpu.memory_space<vmem>>, %arg9: memref<16x32xf32, #tpu.memory_space<vmem>>, %arg10: memref<2x2x32xf32, #tpu.memory_space<vmem>>, %arg11: memref<2x2x32xf32, #tpu.memory_space<vmem>>, %arg12: memref<16x32xf32, #tpu.memory_space<vmem>>, %arg13: memref<16x128xf32, #tpu.memory_space<vmem>>) attributes {dimension_semantics = [], scalar_prefetch = 0 : i64, scratch_operands = 2 : i64, tpu.core_type = #tpu.core_type<tc>} {
    %c0 = arith.constant 0 : index
    %c0_0 = arith.constant 0 : index
    %0 = vector.load %arg1[%c0, %c0_0] : memref<4x128xf32, #tpu.memory_space<vmem>>, vector<4x128xf32>
    %c0_1 = arith.constant 0 : index
    %c0_2 = arith.constant 0 : index
    %1 = vector.load %arg2[%c0_1, %c0_2] : memref<32x128xf32, #tpu.memory_space<vmem>>, vector<32x128xf32>
    %c0_3 = arith.constant 0 : index
    %c0_4 = arith.constant 0 : index
    %2 = vector.load %arg3[%c0_3, %c0_4] : memref<1x128xf32, #tpu.memory_space<vmem>>, vector<1x128xf32>
    %c0_5 = arith.constant 0 : index
    %c0_6 = arith.constant 0 : index
    %3 = vector.load %arg0[%c0_5, %c0_6] : memref<16x4xf32, #tpu.memory_space<vmem>>, vector<16x4xf32>
    %cst = arith.constant dense<0.000000e+00> : vector<16x128xf32>
    %4 = tpu.matmul %3, %0, %cst {dimension_numbers = #tpu.dot_dimension_numbers<[1], [0], [0], [1], [0, 0, 1, 1], [], []>} : vector<16x4xf32>, vector<4x128xf32>, vector<16x128xf32> -> vector<16x128xf32>
    %5 = vector.broadcast %2 : vector<1x128xf32> to vector<16x128xf32>
    %6 = arith.addf %4, %5 : vector<16x128xf32>
    %c0_7 = arith.constant 0 : index
    %c0_8 = arith.constant 0 : index
    %7 = vector.load %arg13[%c0_7, %c0_8] : memref<16x128xf32, #tpu.memory_space<vmem>>, vector<16x128xf32>
    tpu.vector_store %arg13[%c0_7, %c0_8], %6 {strides = array<i32>} : memref<16x128xf32, #tpu.memory_space<vmem>>, vector<16x128xf32>,
    %c0_9 = arith.constant 0 : index
    %c0_10 = arith.constant 0 : index
    %c0_11 = arith.constant 0 : index
    %8 = vector.load %arg7[%c0_9, %c0_10, %c0_11] : memref<2x2x32xf32, #tpu.memory_space<vmem>>, vector<1x2x32xf32>
    %9 = vector.shape_cast %8 : vector<1x2x32xf32> to vector<2x32xf32>
    %c0_12 = arith.constant 0 : index
    %c0_13 = arith.constant 0 : index
    %c0_14 = arith.constant 0 : index
    %10 = vector.load %arg8[%c0_12, %c0_13, %c0_14] : memref<2x2x32xf32, #tpu.memory_space<vmem>>, vector<1x2x32xf32>
    %11 = vector.shape_cast %10 : vector<1x2x32xf32> to vector<2x32xf32>
    %c0_i32 = arith.constant 0 : i32
    %c2_i32 = arith.constant 2 : i32
    %12 = arith.muli %c0_i32, %c2_i32 : i32
    %13 = arith.index_cast %12 : i32 to index
    %c0_15 = arith.constant 0 : index
    %14 = vector.load %arg13[%13, %c0_15] : memref<16x128xf32, #tpu.memory_space<vmem>>, vector<2x128xf32>
    %cst_16 = arith.constant dense<0.000000e+00> : vector<2x128xf32>
    %15 = tpu.matmul %9, %1, %cst_16 {dimension_numbers = #tpu.dot_dimension_numbers<[1], [0], [0], [1], [0, 0, 1, 1], [], []>} : vector<2x32xf32>, vector<32x128xf32>, vector<2x128xf32> -> vector<2x128xf32>
    %16 = arith.addf %14, %15 : vector<2x128xf32>
    %17 = vector.extract_strided_slice %16 {offsets = [0, 0], sizes = [2, 96], strides = [1, 1]} : vector<2x128xf32> to vector<2x96xf32>
    %18 = arith.negf %17 : vector<2x96xf32>
    %19 = math.exp %18 : vector<2x96xf32>
    %cst_17 = arith.constant 1.000000e+00 : f32
    %20 = vector.broadcast %cst_17 : f32 to vector<2x96xf32>
    %21 = arith.addf %20, %19 : vector<2x96xf32>
    %22 = arith.divf %20, %21 : vector<2x96xf32>
    %23 = vector.extract_strided_slice %16 {offsets = [0, 96], sizes = [2, 32], strides = [1, 1]} : vector<2x128xf32> to vector<2x32xf32>
    %24 = math.tanh %23 : vector<2x32xf32>
    %25 = vector.extract_strided_slice %22 {offsets = [0, 0], sizes = [2, 32], strides = [1, 1]} : vector<2x96xf32> to vector<2x32xf32>
    %26 = vector.extract_strided_slice %22 {offsets = [0, 32], sizes = [2, 32], strides = [1, 1]} : vector<2x96xf32> to vector<2x32xf32>
    %27 = vector.extract_strided_slice %22 {offsets = [0, 64], sizes = [2, 32], strides = [1, 1]} : vector<2x96xf32> to vector<2x32xf32>
    %28 = arith.mulf %26, %11 : vector<2x32xf32>
    %29 = arith.mulf %25, %24 : vector<2x32xf32>
    %30 = arith.addf %28, %29 : vector<2x32xf32>
    %31 = math.tanh %30 : vector<2x32xf32>
    %32 = arith.mulf %27, %31 : vector<2x32xf32>
    %33 = arith.index_cast %12 : i32 to index
    %c0_18 = arith.constant 0 : index
    %34 = vector.load %arg12[%33, %c0_18] : memref<16x32xf32, #tpu.memory_space<vmem>>, vector<2x32xf32>
    tpu.vector_store %arg12[%33, %c0_18], %32 {strides = array<i32>} : memref<16x32xf32, #tpu.memory_space<vmem>>, vector<2x32xf32>,
    %c1_i32 = arith.constant 1 : i32
    %c2_i32_19 = arith.constant 2 : i32
    %35 = arith.muli %c1_i32, %c2_i32_19 : i32
    %36 = arith.index_cast %35 : i32 to index
    %c0_20 = arith.constant 0 : index
    %37 = vector.load %arg13[%36, %c0_20] : memref<16x128xf32, #tpu.memory_space<vmem>>, vector<2x128xf32>
    %cst_21 = arith.constant dense<0.000000e+00> : vector<2x128xf32>
    %38 = tpu.matmul %32, %1, %cst_21 {dimension_numbers = #tpu.dot_dimension_numbers<[1], [0], [0], [1], [0, 0, 1, 1], [], []>} : vector<2x32xf32>, vector<32x128xf32>, vector<2x128xf32> -> vector<2x128xf32>
    %39 = arith.addf %37, %38 : vector<2x128xf32>
    %40 = vector.extract_strided_slice %39 {offsets = [0, 0], sizes = [2, 96], strides = [1, 1]} : vector<2x128xf32> to vector<2x96xf32>
    %41 = arith.negf %40 : vector<2x96xf32>
    %42 = math.exp %41 : vector<2x96xf32>
    %cst_22 = arith.constant 1.000000e+00 : f32
    %43 = vector.broadcast %cst_22 : f32 to vector<2x96xf32>
    %44 = arith.addf %43, %42 : vector<2x96xf32>
    %45 = arith.divf %43, %44 : vector<2x96xf32>
    %46 = vector.extract_strided_slice %39 {offsets = [0, 96], sizes = [2, 32], strides = [1, 1]} : vector<2x128xf32> to vector<2x32xf32>
    %47 = math.tanh %46 : vector<2x32xf32>
    %48 = vector.extract_strided_slice %45 {offsets = [0, 0], sizes = [2, 32], strides = [1, 1]} : vector<2x96xf32> to vector<2x32xf32>
    %49 = vector.extract_strided_slice %45 {offsets = [0, 32], sizes = [2, 32], strides = [1, 1]} : vector<2x96xf32> to vector<2x32xf32>
    %50 = vector.extract_strided_slice %45 {offsets = [0, 64], sizes = [2, 32], strides = [1, 1]} : vector<2x96xf32> to vector<2x32xf32>
    %51 = arith.mulf %49, %30 : vector<2x32xf32>
    %52 = arith.mulf %48, %47 : vector<2x32xf32>
    %53 = arith.addf %51, %52 : vector<2x32xf32>
    %54 = math.tanh %53 : vector<2x32xf32>
    %55 = arith.mulf %50, %54 : vector<2x32xf32>
    %56 = arith.index_cast %35 : i32 to index
    %c0_23 = arith.constant 0 : index
    %57 = vector.load %arg12[%56, %c0_23] : memref<16x32xf32, #tpu.memory_space<vmem>>, vector<2x32xf32>
    tpu.vector_store %arg12[%56, %c0_23], %55 {strides = array<i32>} : memref<16x32xf32, #tpu.memory_space<vmem>>, vector<2x32xf32>,
    %c2_i32_24 = arith.constant 2 : i32
    %c2_i32_25 = arith.constant 2 : i32
    %58 = arith.muli %c2_i32_24, %c2_i32_25 : i32
    %59 = arith.index_cast %58 : i32 to index
    %c0_26 = arith.constant 0 : index
    %60 = vector.load %arg13[%59, %c0_26] : memref<16x128xf32, #tpu.memory_space<vmem>>, vector<2x128xf32>
    %cst_27 = arith.constant dense<0.000000e+00> : vector<2x128xf32>
    %61 = tpu.matmul %55, %1, %cst_27 {dimension_numbers = #tpu.dot_dimension_numbers<[1], [0], [0], [1], [0, 0, 1, 1], [], []>} : vector<2x32xf32>, vector<32x128xf32>, vector<2x128xf32> -> vector<2x128xf32>
    %62 = arith.addf %60, %61 : vector<2x128xf32>
    %63 = vector.extract_strided_slice %62 {offsets = [0, 0], sizes = [2, 96], strides = [1, 1]} : vector<2x128xf32> to vector<2x96xf32>
    %64 = arith.negf %63 : vector<2x96xf32>
    %65 = math.exp %64 : vector<2x96xf32>
    %cst_28 = arith.constant 1.000000e+00 : f32
    %66 = vector.broadcast %cst_28 : f32 to vector<2x96xf32>
    %67 = arith.addf %66, %65 : vector<2x96xf32>
    %68 = arith.divf %66, %67 : vector<2x96xf32>
    %69 = vector.extract_strided_slice %62 {offsets = [0, 96], sizes = [2, 32], strides = [1, 1]} : vector<2x128xf32> to vector<2x32xf32>
    %70 = math.tanh %69 : vector<2x32xf32>
    %71 = vector.extract_strided_slice %68 {offsets = [0, 0], sizes = [2, 32], strides = [1, 1]} : vector<2x96xf32> to vector<2x32xf32>
    %72 = vector.extract_strided_slice %68 {offsets = [0, 32], sizes = [2, 32], strides = [1, 1]} : vector<2x96xf32> to vector<2x32xf32>
    %73 = vector.extract_strided_slice %68 {offsets = [0, 64], sizes = [2, 32], strides = [1, 1]} : vector<2x96xf32> to vector<2x32xf32>
    %74 = arith.mulf %72, %53 : vector<2x32xf32>
    %75 = arith.mulf %71, %70 : vector<2x32xf32>
    %76 = arith.addf %74, %75 : vector<2x32xf32>
    %77 = math.tanh %76 : vector<2x32xf32>
    %78 = arith.mulf %73, %77 : vector<2x32xf32>
    %79 = arith.index_cast %58 : i32 to index
    %c0_29 = arith.constant 0 : index
    %80 = vector.load %arg12[%79, %c0_29] : memref<16x32xf32, #tpu.memory_space<vmem>>, vector<2x32xf32>
    tpu.vector_store %arg12[%79, %c0_29], %78 {strides = array<i32>} : memref<16x32xf32, #tpu.memory_space<vmem>>, vector<2x32xf32>,
    %c3_i32 = arith.constant 3 : i32
    %c2_i32_30 = arith.constant 2 : i32
    %81 = arith.muli %c3_i32, %c2_i32_30 : i32
    %82 = arith.index_cast %81 : i32 to index
    %c0_31 = arith.constant 0 : index
    %83 = vector.load %arg13[%82, %c0_31] : memref<16x128xf32, #tpu.memory_space<vmem>>, vector<2x128xf32>
    %cst_32 = arith.constant dense<0.000000e+00> : vector<2x128xf32>
    %84 = tpu.matmul %78, %1, %cst_32 {dimension_numbers = #tpu.dot_dimension_numbers<[1], [0], [0], [1], [0, 0, 1, 1], [], []>} : vector<2x32xf32>, vector<32x128xf32>, vector<2x128xf32> -> vector<2x128xf32>
    %85 = arith.addf %83, %84 : vector<2x128xf32>
    %86 = vector.extract_strided_slice %85 {offsets = [0, 0], sizes = [2, 96], strides = [1, 1]} : vector<2x128xf32> to vector<2x96xf32>
    %87 = arith.negf %86 : vector<2x96xf32>
    %88 = math.exp %87 : vector<2x96xf32>
    %cst_33 = arith.constant 1.000000e+00 : f32
    %89 = vector.broadcast %cst_33 : f32 to vector<2x96xf32>
    %90 = arith.addf %89, %88 : vector<2x96xf32>
    %91 = arith.divf %89, %90 : vector<2x96xf32>
    %92 = vector.extract_strided_slice %85 {offsets = [0, 96], sizes = [2, 32], strides = [1, 1]} : vector<2x128xf32> to vector<2x32xf32>
    %93 = math.tanh %92 : vector<2x32xf32>
    %94 = vector.extract_strided_slice %91 {offsets = [0, 0], sizes = [2, 32], strides = [1, 1]} : vector<2x96xf32> to vector<2x32xf32>
    %95 = vector.extract_strided_slice %91 {offsets = [0, 32], sizes = [2, 32], strides = [1, 1]} : vector<2x96xf32> to vector<2x32xf32>
    %96 = vector.extract_strided_slice %91 {offsets = [0, 64], sizes = [2, 32], strides = [1, 1]} : vector<2x96xf32> to vector<2x32xf32>
    %97 = arith.mulf %95, %76 : vector<2x32xf32>
    %98 = arith.mulf %94, %93 : vector<2x32xf32>
    %99 = arith.addf %97, %98 : vector<2x32xf32>
    %100 = math.tanh %99 : vector<2x32xf32>
    %101 = arith.mulf %96, %100 : vector<2x32xf32>
    %102 = arith.index_cast %81 : i32 to index
    %c0_34 = arith.constant 0 : index
    %103 = vector.load %arg12[%102, %c0_34] : memref<16x32xf32, #tpu.memory_space<vmem>>, vector<2x32xf32>
    tpu.vector_store %arg12[%102, %c0_34], %101 {strides = array<i32>} : memref<16x32xf32, #tpu.memory_space<vmem>>, vector<2x32xf32>,
    %c4_i32 = arith.constant 4 : i32
    %c2_i32_35 = arith.constant 2 : i32
    %104 = arith.muli %c4_i32, %c2_i32_35 : i32
    %105 = arith.index_cast %104 : i32 to index
    %c0_36 = arith.constant 0 : index
    %106 = vector.load %arg13[%105, %c0_36] : memref<16x128xf32, #tpu.memory_space<vmem>>, vector<2x128xf32>
    %cst_37 = arith.constant dense<0.000000e+00> : vector<2x128xf32>
    %107 = tpu.matmul %101, %1, %cst_37 {dimension_numbers = #tpu.dot_dimension_numbers<[1], [0], [0], [1], [0, 0, 1, 1], [], []>} : vector<2x32xf32>, vector<32x128xf32>, vector<2x128xf32> -> vector<2x128xf32>
    %108 = arith.addf %106, %107 : vector<2x128xf32>
    %109 = vector.extract_strided_slice %108 {offsets = [0, 0], sizes = [2, 96], strides = [1, 1]} : vector<2x128xf32> to vector<2x96xf32>
    %110 = arith.negf %109 : vector<2x96xf32>
    %111 = math.exp %110 : vector<2x96xf32>
    %cst_38 = arith.constant 1.000000e+00 : f32
    %112 = vector.broadcast %cst_38 : f32 to vector<2x96xf32>
    %113 = arith.addf %112, %111 : vector<2x96xf32>
    %114 = arith.divf %112, %113 : vector<2x96xf32>
    %115 = vector.extract_strided_slice %108 {offsets = [0, 96], sizes = [2, 32], strides = [1, 1]} : vector<2x128xf32> to vector<2x32xf32>
    %116 = math.tanh %115 : vector<2x32xf32>
    %117 = vector.extract_strided_slice %114 {offsets = [0, 0], sizes = [2, 32], strides = [1, 1]} : vector<2x96xf32> to vector<2x32xf32>
    %118 = vector.extract_strided_slice %114 {offsets = [0, 32], sizes = [2, 32], strides = [1, 1]} : vector<2x96xf32> to vector<2x32xf32>
    %119 = vector.extract_strided_slice %114 {offsets = [0, 64], sizes = [2, 32], strides = [1, 1]} : vector<2x96xf32> to vector<2x32xf32>
    %120 = arith.mulf %118, %99 : vector<2x32xf32>
    %121 = arith.mulf %117, %116 : vector<2x32xf32>
    %122 = arith.addf %120, %121 : vector<2x32xf32>
    %123 = math.tanh %122 : vector<2x32xf32>
    %124 = arith.mulf %119, %123 : vector<2x32xf32>
    %125 = arith.index_cast %104 : i32 to index
    %c0_39 = arith.constant 0 : index
    %126 = vector.load %arg12[%125, %c0_39] : memref<16x32xf32, #tpu.memory_space<vmem>>, vector<2x32xf32>
    tpu.vector_store %arg12[%125, %c0_39], %124 {strides = array<i32>} : memref<16x32xf32, #tpu.memory_space<vmem>>, vector<2x32xf32>,
    %c5_i32 = arith.constant 5 : i32
    %c2_i32_40 = arith.constant 2 : i32
    %127 = arith.muli %c5_i32, %c2_i32_40 : i32
    %128 = arith.index_cast %127 : i32 to index
    %c0_41 = arith.constant 0 : index
    %129 = vector.load %arg13[%128, %c0_41] : memref<16x128xf32, #tpu.memory_space<vmem>>, vector<2x128xf32>
    %cst_42 = arith.constant dense<0.000000e+00> : vector<2x128xf32>
    %130 = tpu.matmul %124, %1, %cst_42 {dimension_numbers = #tpu.dot_dimension_numbers<[1], [0], [0], [1], [0, 0, 1, 1], [], []>} : vector<2x32xf32>, vector<32x128xf32>, vector<2x128xf32> -> vector<2x128xf32>
    %131 = arith.addf %129, %130 : vector<2x128xf32>
    %132 = vector.extract_strided_slice %131 {offsets = [0, 0], sizes = [2, 96], strides = [1, 1]} : vector<2x128xf32> to vector<2x96xf32>
    %133 = arith.negf %132 : vector<2x96xf32>
    %134 = math.exp %133 : vector<2x96xf32>
    %cst_43 = arith.constant 1.000000e+00 : f32
    %135 = vector.broadcast %cst_43 : f32 to vector<2x96xf32>
    %136 = arith.addf %135, %134 : vector<2x96xf32>
    %137 = arith.divf %135, %136 : vector<2x96xf32>
    %138 = vector.extract_strided_slice %131 {offsets = [0, 96], sizes = [2, 32], strides = [1, 1]} : vector<2x128xf32> to vector<2x32xf32>
    %139 = math.tanh %138 : vector<2x32xf32>
    %140 = vector.extract_strided_slice %137 {offsets = [0, 0], sizes = [2, 32], strides = [1, 1]} : vector<2x96xf32> to vector<2x32xf32>
    %141 = vector.extract_strided_slice %137 {offsets = [0, 32], sizes = [2, 32], strides = [1, 1]} : vector<2x96xf32> to vector<2x32xf32>
    %142 = vector.extract_strided_slice %137 {offsets = [0, 64], sizes = [2, 32], strides = [1, 1]} : vector<2x96xf32> to vector<2x32xf32>
    %143 = arith.mulf %141, %122 : vector<2x32xf32>
    %144 = arith.mulf %140, %139 : vector<2x32xf32>
    %145 = arith.addf %143, %144 : vector<2x32xf32>
    %146 = math.tanh %145 : vector<2x32xf32>
    %147 = arith.mulf %142, %146 : vector<2x32xf32>
    %148 = arith.index_cast %127 : i32 to index
    %c0_44 = arith.constant 0 : index
    %149 = vector.load %arg12[%148, %c0_44] : memref<16x32xf32, #tpu.memory_space<vmem>>, vector<2x32xf32>
    tpu.vector_store %arg12[%148, %c0_44], %147 {strides = array<i32>} : memref<16x32xf32, #tpu.memory_space<vmem>>, vector<2x32xf32>,
    %c6_i32 = arith.constant 6 : i32
    %c2_i32_45 = arith.constant 2 : i32
    %150 = arith.muli %c6_i32, %c2_i32_45 : i32
    %151 = arith.index_cast %150 : i32 to index
    %c0_46 = arith.constant 0 : index
    %152 = vector.load %arg13[%151, %c0_46] : memref<16x128xf32, #tpu.memory_space<vmem>>, vector<2x128xf32>
    %cst_47 = arith.constant dense<0.000000e+00> : vector<2x128xf32>
    %153 = tpu.matmul %147, %1, %cst_47 {dimension_numbers = #tpu.dot_dimension_numbers<[1], [0], [0], [1], [0, 0, 1, 1], [], []>} : vector<2x32xf32>, vector<32x128xf32>, vector<2x128xf32> -> vector<2x128xf32>
    %154 = arith.addf %152, %153 : vector<2x128xf32>
    %155 = vector.extract_strided_slice %154 {offsets = [0, 0], sizes = [2, 96], strides = [1, 1]} : vector<2x128xf32> to vector<2x96xf32>
    %156 = arith.negf %155 : vector<2x96xf32>
    %157 = math.exp %156 : vector<2x96xf32>
    %cst_48 = arith.constant 1.000000e+00 : f32
    %158 = vector.broadcast %cst_48 : f32 to vector<2x96xf32>
    %159 = arith.addf %158, %157 : vector<2x96xf32>
    %160 = arith.divf %158, %159 : vector<2x96xf32>
    %161 = vector.extract_strided_slice %154 {offsets = [0, 96], sizes = [2, 32], strides = [1, 1]} : vector<2x128xf32> to vector<2x32xf32>
    %162 = math.tanh %161 : vector<2x32xf32>
    %163 = vector.extract_strided_slice %160 {offsets = [0, 0], sizes = [2, 32], strides = [1, 1]} : vector<2x96xf32> to vector<2x32xf32>
    %164 = vector.extract_strided_slice %160 {offsets = [0, 32], sizes = [2, 32], strides = [1, 1]} : vector<2x96xf32> to vector<2x32xf32>
    %165 = vector.extract_strided_slice %160 {offsets = [0, 64], sizes = [2, 32], strides = [1, 1]} : vector<2x96xf32> to vector<2x32xf32>
    %166 = arith.mulf %164, %145 : vector<2x32xf32>
    %167 = arith.mulf %163, %162 : vector<2x32xf32>
    %168 = arith.addf %166, %167 : vector<2x32xf32>
    %169 = math.tanh %168 : vector<2x32xf32>
    %170 = arith.mulf %165, %169 : vector<2x32xf32>
    %171 = arith.index_cast %150 : i32 to index
    %c0_49 = arith.constant 0 : index
    %172 = vector.load %arg12[%171, %c0_49] : memref<16x32xf32, #tpu.memory_space<vmem>>, vector<2x32xf32>
    tpu.vector_store %arg12[%171, %c0_49], %170 {strides = array<i32>} : memref<16x32xf32, #tpu.memory_space<vmem>>, vector<2x32xf32>,
    %c7_i32 = arith.constant 7 : i32
    %c2_i32_50 = arith.constant 2 : i32
    %173 = arith.muli %c7_i32, %c2_i32_50 : i32
    %174 = arith.index_cast %173 : i32 to index
    %c0_51 = arith.constant 0 : index
    %175 = vector.load %arg13[%174, %c0_51] : memref<16x128xf32, #tpu.memory_space<vmem>>, vector<2x128xf32>
    %cst_52 = arith.constant dense<0.000000e+00> : vector<2x128xf32>
    %176 = tpu.matmul %170, %1, %cst_52 {dimension_numbers = #tpu.dot_dimension_numbers<[1], [0], [0], [1], [0, 0, 1, 1], [], []>} : vector<2x32xf32>, vector<32x128xf32>, vector<2x128xf32> -> vector<2x128xf32>
    %177 = arith.addf %175, %176 : vector<2x128xf32>
    %178 = vector.extract_strided_slice %177 {offsets = [0, 0], sizes = [2, 96], strides = [1, 1]} : vector<2x128xf32> to vector<2x96xf32>
    %179 = arith.negf %178 : vector<2x96xf32>
    %180 = math.exp %179 : vector<2x96xf32>
    %cst_53 = arith.constant 1.000000e+00 : f32
    %181 = vector.broadcast %cst_53 : f32 to vector<2x96xf32>
    %182 = arith.addf %181, %180 : vector<2x96xf32>
    %183 = arith.divf %181, %182 : vector<2x96xf32>
    %184 = vector.extract_strided_slice %177 {offsets = [0, 96], sizes = [2, 32], strides = [1, 1]} : vector<2x128xf32> to vector<2x32xf32>
    %185 = math.tanh %184 : vector<2x32xf32>
    %186 = vector.extract_strided_slice %183 {offsets = [0, 0], sizes = [2, 32], strides = [1, 1]} : vector<2x96xf32> to vector<2x32xf32>
    %187 = vector.extract_strided_slice %183 {offsets = [0, 32], sizes = [2, 32], strides = [1, 1]} : vector<2x96xf32> to vector<2x32xf32>
    %188 = vector.extract_strided_slice %183 {offsets = [0, 64], sizes = [2, 32], strides = [1, 1]} : vector<2x96xf32> to vector<2x32xf32>
    %189 = arith.mulf %187, %168 : vector<2x32xf32>
    %190 = arith.mulf %186, %185 : vector<2x32xf32>
    %191 = arith.addf %189, %190 : vector<2x32xf32>
    %192 = math.tanh %191 : vector<2x32xf32>
    %193 = arith.mulf %188, %192 : vector<2x32xf32>
    %194 = arith.index_cast %173 : i32 to index
    %c0_54 = arith.constant 0 : index
    %195 = vector.load %arg12[%194, %c0_54] : memref<16x32xf32, #tpu.memory_space<vmem>>, vector<2x32xf32>
    tpu.vector_store %arg12[%194, %c0_54], %193 {strides = array<i32>} : memref<16x32xf32, #tpu.memory_space<vmem>>, vector<2x32xf32>,
    %c8_i32 = arith.constant 8 : i32
    %c0_55 = arith.constant 0 : index
    %c0_56 = arith.constant 0 : index
    %c0_57 = arith.constant 0 : index
    %196 = vector.load %arg10[%c0_55, %c0_56, %c0_57] : memref<2x2x32xf32, #tpu.memory_space<vmem>>, vector<1x2x32xf32>
    %197 = vector.shape_cast %196 : vector<1x2x32xf32> to vector<2x32xf32>
    %198 = vector.shape_cast %193 : vector<2x32xf32> to vector<1x2x32xf32>
    tpu.vector_store %arg10[%c0_55, %c0_56, %c0_57], %198 {strides = array<i32>} : memref<2x2x32xf32, #tpu.memory_space<vmem>>, vector<1x2x32xf32>,
    %c0_58 = arith.constant 0 : index
    %c0_59 = arith.constant 0 : index
    %c0_60 = arith.constant 0 : index
    %199 = vector.load %arg11[%c0_58, %c0_59, %c0_60] : memref<2x2x32xf32, #tpu.memory_space<vmem>>, vector<1x2x32xf32>
    %200 = vector.shape_cast %199 : vector<1x2x32xf32> to vector<2x32xf32>
    %201 = vector.shape_cast %191 : vector<2x32xf32> to vector<1x2x32xf32>
    tpu.vector_store %arg11[%c0_58, %c0_59, %c0_60], %201 {strides = array<i32>} : memref<2x2x32xf32, #tpu.memory_space<vmem>>, vector<1x2x32xf32>,
    %c0_61 = arith.constant 0 : index
    %c0_62 = arith.constant 0 : index
    %202 = vector.load %arg4[%c0_61, %c0_62] : memref<32x128xf32, #tpu.memory_space<vmem>>, vector<32x128xf32>
    %c0_63 = arith.constant 0 : index
    %c0_64 = arith.constant 0 : index
    %203 = vector.load %arg5[%c0_63, %c0_64] : memref<32x128xf32, #tpu.memory_space<vmem>>, vector<32x128xf32>
    %c0_65 = arith.constant 0 : index
    %c0_66 = arith.constant 0 : index
    %204 = vector.load %arg6[%c0_65, %c0_66] : memref<1x128xf32, #tpu.memory_space<vmem>>, vector<1x128xf32>
    %c0_67 = arith.constant 0 : index
    %c0_68 = arith.constant 0 : index
    %205 = vector.load %arg12[%c0_67, %c0_68] : memref<16x32xf32, #tpu.memory_space<vmem>>, vector<16x32xf32>
    %cst_69 = arith.constant dense<0.000000e+00> : vector<16x128xf32>
    %206 = tpu.matmul %205, %202, %cst_69 {dimension_numbers = #tpu.dot_dimension_numbers<[1], [0], [0], [1], [0, 0, 1, 1], [], []>} : vector<16x32xf32>, vector<32x128xf32>, vector<16x128xf32> -> vector<16x128xf32>
    %207 = vector.broadcast %204 : vector<1x128xf32> to vector<16x128xf32>
    %208 = arith.addf %206, %207 : vector<16x128xf32>
    %c0_70 = arith.constant 0 : index
    %c0_71 = arith.constant 0 : index
    %209 = vector.load %arg13[%c0_70, %c0_71] : memref<16x128xf32, #tpu.memory_space<vmem>>, vector<16x128xf32>
    tpu.vector_store %arg13[%c0_70, %c0_71], %208 {strides = array<i32>} : memref<16x128xf32, #tpu.memory_space<vmem>>, vector<16x128xf32>,
    %c1 = arith.constant 1 : index
    %c0_72 = arith.constant 0 : index
    %c0_73 = arith.constant 0 : index
    %210 = vector.load %arg7[%c1, %c0_72, %c0_73] : memref<2x2x32xf32, #tpu.memory_space<vmem>>, vector<1x2x32xf32>
    %211 = vector.shape_cast %210 : vector<1x2x32xf32> to vector<2x32xf32>
    %c1_74 = arith.constant 1 : index
    %c0_75 = arith.constant 0 : index
    %c0_76 = arith.constant 0 : index
    %212 = vector.load %arg8[%c1_74, %c0_75, %c0_76] : memref<2x2x32xf32, #tpu.memory_space<vmem>>, vector<1x2x32xf32>
    %213 = vector.shape_cast %212 : vector<1x2x32xf32> to vector<2x32xf32>
    %c0_i32_77 = arith.constant 0 : i32
    %c2_i32_78 = arith.constant 2 : i32
    %214 = arith.muli %c0_i32_77, %c2_i32_78 : i32
    %215 = arith.index_cast %214 : i32 to index
    %c0_79 = arith.constant 0 : index
    %216 = vector.load %arg13[%215, %c0_79] : memref<16x128xf32, #tpu.memory_space<vmem>>, vector<2x128xf32>
    %cst_80 = arith.constant dense<0.000000e+00> : vector<2x128xf32>
    %217 = tpu.matmul %211, %203, %cst_80 {dimension_numbers = #tpu.dot_dimension_numbers<[1], [0], [0], [1], [0, 0, 1, 1], [], []>} : vector<2x32xf32>, vector<32x128xf32>, vector<2x128xf32> -> vector<2x128xf32>
    %218 = arith.addf %216, %217 : vector<2x128xf32>
    %219 = vector.extract_strided_slice %218 {offsets = [0, 0], sizes = [2, 96], strides = [1, 1]} : vector<2x128xf32> to vector<2x96xf32>
    %220 = arith.negf %219 : vector<2x96xf32>
    %221 = math.exp %220 : vector<2x96xf32>
    %cst_81 = arith.constant 1.000000e+00 : f32
    %222 = vector.broadcast %cst_81 : f32 to vector<2x96xf32>
    %223 = arith.addf %222, %221 : vector<2x96xf32>
    %224 = arith.divf %222, %223 : vector<2x96xf32>
    %225 = vector.extract_strided_slice %218 {offsets = [0, 96], sizes = [2, 32], strides = [1, 1]} : vector<2x128xf32> to vector<2x32xf32>
    %226 = math.tanh %225 : vector<2x32xf32>
    %227 = vector.extract_strided_slice %224 {offsets = [0, 0], sizes = [2, 32], strides = [1, 1]} : vector<2x96xf32> to vector<2x32xf32>
    %228 = vector.extract_strided_slice %224 {offsets = [0, 32], sizes = [2, 32], strides = [1, 1]} : vector<2x96xf32> to vector<2x32xf32>
    %229 = vector.extract_strided_slice %224 {offsets = [0, 64], sizes = [2, 32], strides = [1, 1]} : vector<2x96xf32> to vector<2x32xf32>
    %230 = arith.mulf %228, %213 : vector<2x32xf32>
    %231 = arith.mulf %227, %226 : vector<2x32xf32>
    %232 = arith.addf %230, %231 : vector<2x32xf32>
    %233 = math.tanh %232 : vector<2x32xf32>
    %234 = arith.mulf %229, %233 : vector<2x32xf32>
    %235 = arith.index_cast %214 : i32 to index
    %c0_82 = arith.constant 0 : index
    %236 = vector.load %arg12[%235, %c0_82] : memref<16x32xf32, #tpu.memory_space<vmem>>, vector<2x32xf32>
    tpu.vector_store %arg12[%235, %c0_82], %234 {strides = array<i32>} : memref<16x32xf32, #tpu.memory_space<vmem>>, vector<2x32xf32>,
    %c1_i32_83 = arith.constant 1 : i32
    %c2_i32_84 = arith.constant 2 : i32
    %237 = arith.muli %c1_i32_83, %c2_i32_84 : i32
    %238 = arith.index_cast %237 : i32 to index
    %c0_85 = arith.constant 0 : index
    %239 = vector.load %arg13[%238, %c0_85] : memref<16x128xf32, #tpu.memory_space<vmem>>, vector<2x128xf32>
    %cst_86 = arith.constant dense<0.000000e+00> : vector<2x128xf32>
    %240 = tpu.matmul %234, %203, %cst_86 {dimension_numbers = #tpu.dot_dimension_numbers<[1], [0], [0], [1], [0, 0, 1, 1], [], []>} : vector<2x32xf32>, vector<32x128xf32>, vector<2x128xf32> -> vector<2x128xf32>
    %241 = arith.addf %239, %240 : vector<2x128xf32>
    %242 = vector.extract_strided_slice %241 {offsets = [0, 0], sizes = [2, 96], strides = [1, 1]} : vector<2x128xf32> to vector<2x96xf32>
    %243 = arith.negf %242 : vector<2x96xf32>
    %244 = math.exp %243 : vector<2x96xf32>
    %cst_87 = arith.constant 1.000000e+00 : f32
    %245 = vector.broadcast %cst_87 : f32 to vector<2x96xf32>
    %246 = arith.addf %245, %244 : vector<2x96xf32>
    %247 = arith.divf %245, %246 : vector<2x96xf32>
    %248 = vector.extract_strided_slice %241 {offsets = [0, 96], sizes = [2, 32], strides = [1, 1]} : vector<2x128xf32> to vector<2x32xf32>
    %249 = math.tanh %248 : vector<2x32xf32>
    %250 = vector.extract_strided_slice %247 {offsets = [0, 0], sizes = [2, 32], strides = [1, 1]} : vector<2x96xf32> to vector<2x32xf32>
    %251 = vector.extract_strided_slice %247 {offsets = [0, 32], sizes = [2, 32], strides = [1, 1]} : vector<2x96xf32> to vector<2x32xf32>
    %252 = vector.extract_strided_slice %247 {offsets = [0, 64], sizes = [2, 32], strides = [1, 1]} : vector<2x96xf32> to vector<2x32xf32>
    %253 = arith.mulf %251, %232 : vector<2x32xf32>
    %254 = arith.mulf %250, %249 : vector<2x32xf32>
    %255 = arith.addf %253, %254 : vector<2x32xf32>
    %256 = math.tanh %255 : vector<2x32xf32>
    %257 = arith.mulf %252, %256 : vector<2x32xf32>
    %258 = arith.index_cast %237 : i32 to index
    %c0_88 = arith.constant 0 : index
    %259 = vector.load %arg12[%258, %c0_88] : memref<16x32xf32, #tpu.memory_space<vmem>>, vector<2x32xf32>
    tpu.vector_store %arg12[%258, %c0_88], %257 {strides = array<i32>} : memref<16x32xf32, #tpu.memory_space<vmem>>, vector<2x32xf32>,
    %c2_i32_89 = arith.constant 2 : i32
    %c2_i32_90 = arith.constant 2 : i32
    %260 = arith.muli %c2_i32_89, %c2_i32_90 : i32
    %261 = arith.index_cast %260 : i32 to index
    %c0_91 = arith.constant 0 : index
    %262 = vector.load %arg13[%261, %c0_91] : memref<16x128xf32, #tpu.memory_space<vmem>>, vector<2x128xf32>
    %cst_92 = arith.constant dense<0.000000e+00> : vector<2x128xf32>
    %263 = tpu.matmul %257, %203, %cst_92 {dimension_numbers = #tpu.dot_dimension_numbers<[1], [0], [0], [1], [0, 0, 1, 1], [], []>} : vector<2x32xf32>, vector<32x128xf32>, vector<2x128xf32> -> vector<2x128xf32>
    %264 = arith.addf %262, %263 : vector<2x128xf32>
    %265 = vector.extract_strided_slice %264 {offsets = [0, 0], sizes = [2, 96], strides = [1, 1]} : vector<2x128xf32> to vector<2x96xf32>
    %266 = arith.negf %265 : vector<2x96xf32>
    %267 = math.exp %266 : vector<2x96xf32>
    %cst_93 = arith.constant 1.000000e+00 : f32
    %268 = vector.broadcast %cst_93 : f32 to vector<2x96xf32>
    %269 = arith.addf %268, %267 : vector<2x96xf32>
    %270 = arith.divf %268, %269 : vector<2x96xf32>
    %271 = vector.extract_strided_slice %264 {offsets = [0, 96], sizes = [2, 32], strides = [1, 1]} : vector<2x128xf32> to vector<2x32xf32>
    %272 = math.tanh %271 : vector<2x32xf32>
    %273 = vector.extract_strided_slice %270 {offsets = [0, 0], sizes = [2, 32], strides = [1, 1]} : vector<2x96xf32> to vector<2x32xf32>
    %274 = vector.extract_strided_slice %270 {offsets = [0, 32], sizes = [2, 32], strides = [1, 1]} : vector<2x96xf32> to vector<2x32xf32>
    %275 = vector.extract_strided_slice %270 {offsets = [0, 64], sizes = [2, 32], strides = [1, 1]} : vector<2x96xf32> to vector<2x32xf32>
    %276 = arith.mulf %274, %255 : vector<2x32xf32>
    %277 = arith.mulf %273, %272 : vector<2x32xf32>
    %278 = arith.addf %276, %277 : vector<2x32xf32>
    %279 = math.tanh %278 : vector<2x32xf32>
    %280 = arith.mulf %275, %279 : vector<2x32xf32>
    %281 = arith.index_cast %260 : i32 to index
    %c0_94 = arith.constant 0 : index
    %282 = vector.load %arg12[%281, %c0_94] : memref<16x32xf32, #tpu.memory_space<vmem>>, vector<2x32xf32>
    tpu.vector_store %arg12[%281, %c0_94], %280 {strides = array<i32>} : memref<16x32xf32, #tpu.memory_space<vmem>>, vector<2x32xf32>,
    %c3_i32_95 = arith.constant 3 : i32
    %c2_i32_96 = arith.constant 2 : i32
    %283 = arith.muli %c3_i32_95, %c2_i32_96 : i32
    %284 = arith.index_cast %283 : i32 to index
    %c0_97 = arith.constant 0 : index
    %285 = vector.load %arg13[%284, %c0_97] : memref<16x128xf32, #tpu.memory_space<vmem>>, vector<2x128xf32>
    %cst_98 = arith.constant dense<0.000000e+00> : vector<2x128xf32>
    %286 = tpu.matmul %280, %203, %cst_98 {dimension_numbers = #tpu.dot_dimension_numbers<[1], [0], [0], [1], [0, 0, 1, 1], [], []>} : vector<2x32xf32>, vector<32x128xf32>, vector<2x128xf32> -> vector<2x128xf32>
    %287 = arith.addf %285, %286 : vector<2x128xf32>
    %288 = vector.extract_strided_slice %287 {offsets = [0, 0], sizes = [2, 96], strides = [1, 1]} : vector<2x128xf32> to vector<2x96xf32>
    %289 = arith.negf %288 : vector<2x96xf32>
    %290 = math.exp %289 : vector<2x96xf32>
    %cst_99 = arith.constant 1.000000e+00 : f32
    %291 = vector.broadcast %cst_99 : f32 to vector<2x96xf32>
    %292 = arith.addf %291, %290 : vector<2x96xf32>
    %293 = arith.divf %291, %292 : vector<2x96xf32>
    %294 = vector.extract_strided_slice %287 {offsets = [0, 96], sizes = [2, 32], strides = [1, 1]} : vector<2x128xf32> to vector<2x32xf32>
    %295 = math.tanh %294 : vector<2x32xf32>
    %296 = vector.extract_strided_slice %293 {offsets = [0, 0], sizes = [2, 32], strides = [1, 1]} : vector<2x96xf32> to vector<2x32xf32>
    %297 = vector.extract_strided_slice %293 {offsets = [0, 32], sizes = [2, 32], strides = [1, 1]} : vector<2x96xf32> to vector<2x32xf32>
    %298 = vector.extract_strided_slice %293 {offsets = [0, 64], sizes = [2, 32], strides = [1, 1]} : vector<2x96xf32> to vector<2x32xf32>
    %299 = arith.mulf %297, %278 : vector<2x32xf32>
    %300 = arith.mulf %296, %295 : vector<2x32xf32>
    %301 = arith.addf %299, %300 : vector<2x32xf32>
    %302 = math.tanh %301 : vector<2x32xf32>
    %303 = arith.mulf %298, %302 : vector<2x32xf32>
    %304 = arith.index_cast %283 : i32 to index
    %c0_100 = arith.constant 0 : index
    %305 = vector.load %arg12[%304, %c0_100] : memref<16x32xf32, #tpu.memory_space<vmem>>, vector<2x32xf32>
    tpu.vector_store %arg12[%304, %c0_100], %303 {strides = array<i32>} : memref<16x32xf32, #tpu.memory_space<vmem>>, vector<2x32xf32>,
    %c4_i32_101 = arith.constant 4 : i32
    %c2_i32_102 = arith.constant 2 : i32
    %306 = arith.muli %c4_i32_101, %c2_i32_102 : i32
    %307 = arith.index_cast %306 : i32 to index
    %c0_103 = arith.constant 0 : index
    %308 = vector.load %arg13[%307, %c0_103] : memref<16x128xf32, #tpu.memory_space<vmem>>, vector<2x128xf32>
    %cst_104 = arith.constant dense<0.000000e+00> : vector<2x128xf32>
    %309 = tpu.matmul %303, %203, %cst_104 {dimension_numbers = #tpu.dot_dimension_numbers<[1], [0], [0], [1], [0, 0, 1, 1], [], []>} : vector<2x32xf32>, vector<32x128xf32>, vector<2x128xf32> -> vector<2x128xf32>
    %310 = arith.addf %308, %309 : vector<2x128xf32>
    %311 = vector.extract_strided_slice %310 {offsets = [0, 0], sizes = [2, 96], strides = [1, 1]} : vector<2x128xf32> to vector<2x96xf32>
    %312 = arith.negf %311 : vector<2x96xf32>
    %313 = math.exp %312 : vector<2x96xf32>
    %cst_105 = arith.constant 1.000000e+00 : f32
    %314 = vector.broadcast %cst_105 : f32 to vector<2x96xf32>
    %315 = arith.addf %314, %313 : vector<2x96xf32>
    %316 = arith.divf %314, %315 : vector<2x96xf32>
    %317 = vector.extract_strided_slice %310 {offsets = [0, 96], sizes = [2, 32], strides = [1, 1]} : vector<2x128xf32> to vector<2x32xf32>
    %318 = math.tanh %317 : vector<2x32xf32>
    %319 = vector.extract_strided_slice %316 {offsets = [0, 0], sizes = [2, 32], strides = [1, 1]} : vector<2x96xf32> to vector<2x32xf32>
    %320 = vector.extract_strided_slice %316 {offsets = [0, 32], sizes = [2, 32], strides = [1, 1]} : vector<2x96xf32> to vector<2x32xf32>
    %321 = vector.extract_strided_slice %316 {offsets = [0, 64], sizes = [2, 32], strides = [1, 1]} : vector<2x96xf32> to vector<2x32xf32>
    %322 = arith.mulf %320, %301 : vector<2x32xf32>
    %323 = arith.mulf %319, %318 : vector<2x32xf32>
    %324 = arith.addf %322, %323 : vector<2x32xf32>
    %325 = math.tanh %324 : vector<2x32xf32>
    %326 = arith.mulf %321, %325 : vector<2x32xf32>
    %327 = arith.index_cast %306 : i32 to index
    %c0_106 = arith.constant 0 : index
    %328 = vector.load %arg12[%327, %c0_106] : memref<16x32xf32, #tpu.memory_space<vmem>>, vector<2x32xf32>
    tpu.vector_store %arg12[%327, %c0_106], %326 {strides = array<i32>} : memref<16x32xf32, #tpu.memory_space<vmem>>, vector<2x32xf32>,
    %c5_i32_107 = arith.constant 5 : i32
    %c2_i32_108 = arith.constant 2 : i32
    %329 = arith.muli %c5_i32_107, %c2_i32_108 : i32
    %330 = arith.index_cast %329 : i32 to index
    %c0_109 = arith.constant 0 : index
    %331 = vector.load %arg13[%330, %c0_109] : memref<16x128xf32, #tpu.memory_space<vmem>>, vector<2x128xf32>
    %cst_110 = arith.constant dense<0.000000e+00> : vector<2x128xf32>
    %332 = tpu.matmul %326, %203, %cst_110 {dimension_numbers = #tpu.dot_dimension_numbers<[1], [0], [0], [1], [0, 0, 1, 1], [], []>} : vector<2x32xf32>, vector<32x128xf32>, vector<2x128xf32> -> vector<2x128xf32>
    %333 = arith.addf %331, %332 : vector<2x128xf32>
    %334 = vector.extract_strided_slice %333 {offsets = [0, 0], sizes = [2, 96], strides = [1, 1]} : vector<2x128xf32> to vector<2x96xf32>
    %335 = arith.negf %334 : vector<2x96xf32>
    %336 = math.exp %335 : vector<2x96xf32>
    %cst_111 = arith.constant 1.000000e+00 : f32
    %337 = vector.broadcast %cst_111 : f32 to vector<2x96xf32>
    %338 = arith.addf %337, %336 : vector<2x96xf32>
    %339 = arith.divf %337, %338 : vector<2x96xf32>
    %340 = vector.extract_strided_slice %333 {offsets = [0, 96], sizes = [2, 32], strides = [1, 1]} : vector<2x128xf32> to vector<2x32xf32>
    %341 = math.tanh %340 : vector<2x32xf32>
    %342 = vector.extract_strided_slice %339 {offsets = [0, 0], sizes = [2, 32], strides = [1, 1]} : vector<2x96xf32> to vector<2x32xf32>
    %343 = vector.extract_strided_slice %339 {offsets = [0, 32], sizes = [2, 32], strides = [1, 1]} : vector<2x96xf32> to vector<2x32xf32>
    %344 = vector.extract_strided_slice %339 {offsets = [0, 64], sizes = [2, 32], strides = [1, 1]} : vector<2x96xf32> to vector<2x32xf32>
    %345 = arith.mulf %343, %324 : vector<2x32xf32>
    %346 = arith.mulf %342, %341 : vector<2x32xf32>
    %347 = arith.addf %345, %346 : vector<2x32xf32>
    %348 = math.tanh %347 : vector<2x32xf32>
    %349 = arith.mulf %344, %348 : vector<2x32xf32>
    %350 = arith.index_cast %329 : i32 to index
    %c0_112 = arith.constant 0 : index
    %351 = vector.load %arg12[%350, %c0_112] : memref<16x32xf32, #tpu.memory_space<vmem>>, vector<2x32xf32>
    tpu.vector_store %arg12[%350, %c0_112], %349 {strides = array<i32>} : memref<16x32xf32, #tpu.memory_space<vmem>>, vector<2x32xf32>,
    %c6_i32_113 = arith.constant 6 : i32
    %c2_i32_114 = arith.constant 2 : i32
    %352 = arith.muli %c6_i32_113, %c2_i32_114 : i32
    %353 = arith.index_cast %352 : i32 to index
    %c0_115 = arith.constant 0 : index
    %354 = vector.load %arg13[%353, %c0_115] : memref<16x128xf32, #tpu.memory_space<vmem>>, vector<2x128xf32>
    %cst_116 = arith.constant dense<0.000000e+00> : vector<2x128xf32>
    %355 = tpu.matmul %349, %203, %cst_116 {dimension_numbers = #tpu.dot_dimension_numbers<[1], [0], [0], [1], [0, 0, 1, 1], [], []>} : vector<2x32xf32>, vector<32x128xf32>, vector<2x128xf32> -> vector<2x128xf32>
    %356 = arith.addf %354, %355 : vector<2x128xf32>
    %357 = vector.extract_strided_slice %356 {offsets = [0, 0], sizes = [2, 96], strides = [1, 1]} : vector<2x128xf32> to vector<2x96xf32>
    %358 = arith.negf %357 : vector<2x96xf32>
    %359 = math.exp %358 : vector<2x96xf32>
    %cst_117 = arith.constant 1.000000e+00 : f32
    %360 = vector.broadcast %cst_117 : f32 to vector<2x96xf32>
    %361 = arith.addf %360, %359 : vector<2x96xf32>
    %362 = arith.divf %360, %361 : vector<2x96xf32>
    %363 = vector.extract_strided_slice %356 {offsets = [0, 96], sizes = [2, 32], strides = [1, 1]} : vector<2x128xf32> to vector<2x32xf32>
    %364 = math.tanh %363 : vector<2x32xf32>
    %365 = vector.extract_strided_slice %362 {offsets = [0, 0], sizes = [2, 32], strides = [1, 1]} : vector<2x96xf32> to vector<2x32xf32>
    %366 = vector.extract_strided_slice %362 {offsets = [0, 32], sizes = [2, 32], strides = [1, 1]} : vector<2x96xf32> to vector<2x32xf32>
    %367 = vector.extract_strided_slice %362 {offsets = [0, 64], sizes = [2, 32], strides = [1, 1]} : vector<2x96xf32> to vector<2x32xf32>
    %368 = arith.mulf %366, %347 : vector<2x32xf32>
    %369 = arith.mulf %365, %364 : vector<2x32xf32>
    %370 = arith.addf %368, %369 : vector<2x32xf32>
    %371 = math.tanh %370 : vector<2x32xf32>
    %372 = arith.mulf %367, %371 : vector<2x32xf32>
    %373 = arith.index_cast %352 : i32 to index
    %c0_118 = arith.constant 0 : index
    %374 = vector.load %arg12[%373, %c0_118] : memref<16x32xf32, #tpu.memory_space<vmem>>, vector<2x32xf32>
    tpu.vector_store %arg12[%373, %c0_118], %372 {strides = array<i32>} : memref<16x32xf32, #tpu.memory_space<vmem>>, vector<2x32xf32>,
    %c7_i32_119 = arith.constant 7 : i32
    %c2_i32_120 = arith.constant 2 : i32
    %375 = arith.muli %c7_i32_119, %c2_i32_120 : i32
    %376 = arith.index_cast %375 : i32 to index
    %c0_121 = arith.constant 0 : index
    %377 = vector.load %arg13[%376, %c0_121] : memref<16x128xf32, #tpu.memory_space<vmem>>, vector<2x128xf32>
    %cst_122 = arith.constant dense<0.000000e+00> : vector<2x128xf32>
    %378 = tpu.matmul %372, %203, %cst_122 {dimension_numbers = #tpu.dot_dimension_numbers<[1], [0], [0], [1], [0, 0, 1, 1], [], []>} : vector<2x32xf32>, vector<32x128xf32>, vector<2x128xf32> -> vector<2x128xf32>
    %379 = arith.addf %377, %378 : vector<2x128xf32>
    %380 = vector.extract_strided_slice %379 {offsets = [0, 0], sizes = [2, 96], strides = [1, 1]} : vector<2x128xf32> to vector<2x96xf32>
    %381 = arith.negf %380 : vector<2x96xf32>
    %382 = math.exp %381 : vector<2x96xf32>
    %cst_123 = arith.constant 1.000000e+00 : f32
    %383 = vector.broadcast %cst_123 : f32 to vector<2x96xf32>
    %384 = arith.addf %383, %382 : vector<2x96xf32>
    %385 = arith.divf %383, %384 : vector<2x96xf32>
    %386 = vector.extract_strided_slice %379 {offsets = [0, 96], sizes = [2, 32], strides = [1, 1]} : vector<2x128xf32> to vector<2x32xf32>
    %387 = math.tanh %386 : vector<2x32xf32>
    %388 = vector.extract_strided_slice %385 {offsets = [0, 0], sizes = [2, 32], strides = [1, 1]} : vector<2x96xf32> to vector<2x32xf32>
    %389 = vector.extract_strided_slice %385 {offsets = [0, 32], sizes = [2, 32], strides = [1, 1]} : vector<2x96xf32> to vector<2x32xf32>
    %390 = vector.extract_strided_slice %385 {offsets = [0, 64], sizes = [2, 32], strides = [1, 1]} : vector<2x96xf32> to vector<2x32xf32>
    %391 = arith.mulf %389, %370 : vector<2x32xf32>
    %392 = arith.mulf %388, %387 : vector<2x32xf32>
    %393 = arith.addf %391, %392 : vector<2x32xf32>
    %394 = math.tanh %393 : vector<2x32xf32>
    %395 = arith.mulf %390, %394 : vector<2x32xf32>
    %396 = arith.index_cast %375 : i32 to index
    %c0_124 = arith.constant 0 : index
    %397 = vector.load %arg12[%396, %c0_124] : memref<16x32xf32, #tpu.memory_space<vmem>>, vector<2x32xf32>
    tpu.vector_store %arg12[%396, %c0_124], %395 {strides = array<i32>} : memref<16x32xf32, #tpu.memory_space<vmem>>, vector<2x32xf32>,
    %c8_i32_125 = arith.constant 8 : i32
    %c1_126 = arith.constant 1 : index
    %c0_127 = arith.constant 0 : index
    %c0_128 = arith.constant 0 : index
    %398 = vector.load %arg10[%c1_126, %c0_127, %c0_128] : memref<2x2x32xf32, #tpu.memory_space<vmem>>, vector<1x2x32xf32>
    %399 = vector.shape_cast %398 : vector<1x2x32xf32> to vector<2x32xf32>
    %400 = vector.shape_cast %395 : vector<2x32xf32> to vector<1x2x32xf32>
    tpu.vector_store %arg10[%c1_126, %c0_127, %c0_128], %400 {strides = array<i32>} : memref<2x2x32xf32, #tpu.memory_space<vmem>>, vector<1x2x32xf32>,
    %c1_129 = arith.constant 1 : index
    %c0_130 = arith.constant 0 : index
    %c0_131 = arith.constant 0 : index
    %401 = vector.load %arg11[%c1_129, %c0_130, %c0_131] : memref<2x2x32xf32, #tpu.memory_space<vmem>>, vector<1x2x32xf32>
    %402 = vector.shape_cast %401 : vector<1x2x32xf32> to vector<2x32xf32>
    %403 = vector.shape_cast %393 : vector<2x32xf32> to vector<1x2x32xf32>
    tpu.vector_store %arg11[%c1_129, %c0_130, %c0_131], %403 {strides = array<i32>} : memref<2x2x32xf32, #tpu.memory_space<vmem>>, vector<1x2x32xf32>,
    %c0_132 = arith.constant 0 : index
    %c0_133 = arith.constant 0 : index
    %404 = vector.load %arg12[%c0_132, %c0_133] : memref<16x32xf32, #tpu.memory_space<vmem>>, vector<16x32xf32>
    %c0_134 = arith.constant 0 : index
    %c0_135 = arith.constant 0 : index
    %405 = vector.load %arg9[%c0_134, %c0_135] : memref<16x32xf32, #tpu.memory_space<vmem>>, vector<16x32xf32>
    tpu.vector_store %arg9[%c0_134, %c0_135], %404 {strides = array<i32>} : memref<16x32xf32, #tpu.memory_space<vmem>>, vector<16x32xf32>,
    return
  }
}

</mosaic_0001>

<llo_original>
// kernel: tpu_custom_call.1
$region0: #{tpu_custom_call.1}
  #allocation0 [shape = 'u32[]', space=smem, size = 0x4, offset = 0x4, fixed_abs, tag = 'smem constant byte address 0x4 - core index']
  #allocation1 [shape = 'u32[72,128]{1,0:T(1,128)}', space=vmem, size = 0x9000, scoped, tag = 'internal scratch']
  #allocation2 [shape = 'f32[16,32]{1,0:T(8,128)}', space=vmem, size = 0x2000, scoped, tag = 'scratch operand']
  #allocation3 [shape = 'f32[16,128]{1,0:T(8,128)}', space=vmem, size = 0x2000, scoped, tag = 'scratch operand']
  %s0 = inlined_call_operand.vmem [shape: f32[16,4], index: 0, kind: input, shape index: {}]
  %s1 = inlined_call_operand.vmem [shape: f32[4,128], index: 1, kind: input, shape index: {}]
  %s2 = inlined_call_operand.hbm [shape: f32[32,128], index: 2, kind: input, shape index: {}]
  %s3 = inlined_call_operand.vmem [shape: f32[1,128], index: 3, kind: input, shape index: {}]
  %s4 = inlined_call_operand.hbm [shape: f32[32,128], index: 4, kind: input, shape index: {}]
  %s5 = inlined_call_operand.hbm [shape: f32[32,128], index: 5, kind: input, shape index: {}]
  %s6 = inlined_call_operand.vmem [shape: f32[1,128], index: 6, kind: input, shape index: {}]
  %s7 = inlined_call_operand.vmem [shape: f32[2,2,32], index: 7, kind: input, shape index: {}]
  %s8 = inlined_call_operand.vmem [shape: f32[2,2,32], index: 8, kind: input, shape index: {}]
  %s9 = inlined_call_operand.hbm [shape: f32[16,32], index: 9, kind: output, shape index: {0}]
  %s10 = inlined_call_operand.hbm [shape: f32[2,2,32], index: 10, kind: output, shape index: {1}]
  %s11 = inlined_call_operand.hbm [shape: f32[2,2,32], index: 11, kind: output, shape index: {2}]
  %12 = xla_tuple %s9, %s10, %s11
  %s13 = sld [smem:[#allocation0]]
  $region74: #{tpu_custom_call.1} parent=0
    _
  %s15 = ssub.s32 1, %s13
  %s16 = scalar_select 0, %s15, %s13
  $region1: #{tpu_custom_call.1} parent=0
    #allocation4 [shape = 'u8[16384]{0}', space=vmem, size = 0x4000, scoped, tag = 'input window, operand 2, single buffered']
    #allocation5 [shape = 's32[1]{0}', space=sflag, size = 0x4, scoped, tag = 'scoped memory for tpu_custom_call.1']
    #allocation6 [shape = 's32[1]{0}', space=sflag, size = 0x4, scoped, tag = 'scoped memory for tpu_custom_call.1']
    #allocation7 [shape = 'u8[16384]{0}', space=vmem, size = 0x4000, scoped, tag = 'input window, operand 4, single buffered']
    #allocation8 [shape = 's32[1]{0}', space=sflag, size = 0x4, scoped, tag = 'scoped memory for tpu_custom_call.1']
    #allocation9 [shape = 'u8[16384]{0}', space=vmem, size = 0x4000, scoped, tag = 'input window, operand 5, single buffered']
    #allocation10 [shape = 'u8[8192]{0}', space=vmem, size = 0x2000, scoped, tag = 'output window, operand 0, single buffered']
    #allocation11 [shape = 'u8[2048]{0}', space=vmem, size = 0x800, scoped, tag = 'output window, operand 1, single buffered']
    #allocation12 [shape = 's32[1]{0}', space=sflag, size = 0x4, scoped, tag = 'scoped memory for tpu_custom_call.1']
    #allocation13 [shape = 'u8[2048]{0}', space=vmem, size = 0x800, scoped, tag = 'output window, operand 2, single buffered']
    %17 = vsyncpa [#allocation5], 0
    %18 = vsyncpa [#allocation8], 0
    %19 = vsyncpa [#allocation6], 0
    %20 = vsyncpa [#allocation12], 0
    // Predicated region
    $region2: #{tpu_custom_call.1} parent=1 // pred_check
      _
    $region3: #{tpu_custom_call.1} parent=1 // pred_check_branch
      %22 = sbr.rel (0) target = $region5
    $region4: #{tpu_custom_call.1} parent=1 // pred_region
      _
    $region5: #{tpu_custom_call.1} parent=1 // pred_fallthru
      _
    // Predicated region
    $region6: #{tpu_custom_call.1} parent=1 // pred_check
      _
    $region7: #{tpu_custom_call.1} parent=1 // pred_check_branch
      %24 = sbr.rel (0) target = $region9
    $region8: #{tpu_custom_call.1} parent=1 // pred_region
      _
    $region9: #{tpu_custom_call.1} parent=1 // pred_fallthru
      _
    // Predicated region
    $region10: #{tpu_custom_call.1} parent=1 // pred_check
      _
    $region11: #{tpu_custom_call.1} parent=1 // pred_check_branch
      %26 = sbr.rel (0) target = $region13
    $region12: #{tpu_custom_call.1} parent=1 // pred_region
      %28 = vsyncadd [#allocation5], 0
      %s29 = sshll.u32 %s2, 4
      %s30 = int_to_ptr.hbm [resolvable:$true] %s29
      %s31 = sshll.u32 [#allocation4], 4
      %s32 = int_to_ptr.vmem [resolvable:$true] %s31
      %37 = dma.hbm_to_vmem [thread:$0]  %s30, 512, %s32, [#allocation5], 128, 128, 8
    $region13: #{tpu_custom_call.1} parent=1 // pred_fallthru
      _
    // Predicated region
    $region14: #{tpu_custom_call.1} parent=1 // pred_check
      _
    $region15: #{tpu_custom_call.1} parent=1 // pred_check_branch
      %39 = sbr.rel (0) target = $region17
    $region16: #{tpu_custom_call.1} parent=1 // pred_region
      _
    $region17: #{tpu_custom_call.1} parent=1 // pred_fallthru
      _
    // Predicated region
    $region18: #{tpu_custom_call.1} parent=1 // pred_check
      _
    $region19: #{tpu_custom_call.1} parent=1 // pred_check_branch
      %41 = sbr.rel (0) target = $region21
    $region20: #{tpu_custom_call.1} parent=1 // pred_region
      %43 = vsyncadd [#allocation8], 0
      %s44 = sshll.u32 %s4, 4
      %s45 = int_to_ptr.hbm [resolvable:$true] %s44
      %s46 = sshll.u32 [#allocation7], 4
      %s47 = int_to_ptr.vmem [resolvable:$true] %s46
      %52 = dma.hbm_to_vmem [thread:$0]  %s45, 512, %s47, [#allocation8], 128, 128, 8
    $region21: #{tpu_custom_call.1} parent=1 // pred_fallthru
      _
    // Predicated region
    $region22: #{tpu_custom_call.1} parent=1 // pred_check
      _
    $region23: #{tpu_custom_call.1} parent=1 // pred_check_branch
      %54 = sbr.rel (0) target = $region25
    $region24: #{tpu_custom_call.1} parent=1 // pred_region
      %56 = vsyncadd [#allocation8], 0
      %s57 = sshll.u32 %s5, 4
      %s58 = int_to_ptr.hbm [resolvable:$true] %s57
      %s59 = sshll.u32 [#allocation9], 4
      %s60 = int_to_ptr.vmem [resolvable:$true] %s59
      %65 = dma.hbm_to_vmem [thread:$0]  %s58, 512, %s60, [#allocation8], 128, 128, 8
    $region25: #{tpu_custom_call.1} parent=1 // pred_fallthru
      _
    // Predicated region
    $region26: #{tpu_custom_call.1} parent=1 // pred_check
      _
    $region27: #{tpu_custom_call.1} parent=1 // pred_check_branch
      %67 = sbr.rel (0) target = $region29
    $region28: #{tpu_custom_call.1} parent=1 // pred_region
      _
    $region29: #{tpu_custom_call.1} parent=1 // pred_fallthru
      _
    // Predicated region
    $region30: #{tpu_custom_call.1} parent=1 // pred_check
      _
    $region31: #{tpu_custom_call.1} parent=1 // pred_check_branch
      %69 = sbr.rel (0) target = $region33
    $region32: #{tpu_custom_call.1} parent=1 // pred_region
      _
    $region33: #{tpu_custom_call.1} parent=1 // pred_fallthru
      _
    // Predicated region
    $region34: #{tpu_custom_call.1} parent=1 // pred_check
      _
    $region35: #{tpu_custom_call.1} parent=1 // pred_check_branch
      %71 = sbr.rel (0) target = $region37
    $region36: #{tpu_custom_call.1} parent=1 // pred_region
      _
    $region37: #{tpu_custom_call.1} parent=1 // pred_fallthru
      _
    // Predicated region
    $region38: #{tpu_custom_call.1} parent=1 // pred_check
      _
    $region39: #{tpu_custom_call.1} parent=1 // pred_check_branch
      %73 = sbr.rel (0) target = $region41
    $region40: #{tpu_custom_call.1} parent=1 // pred_region
      %75 = dma.done [#allocation5], 512
    $region41: #{tpu_custom_call.1} parent=1 // pred_fallthru
      _
    // Predicated region
    $region42: #{tpu_custom_call.1} parent=1 // pred_check
      _
    $region43: #{tpu_custom_call.1} parent=1 // pred_check_branch
      %77 = sbr.rel (0) target = $region45
    $region44: #{tpu_custom_call.1} parent=1 // pred_region
      %79 = dma.done [#allocation8], 512
    $region45: #{tpu_custom_call.1} parent=1 // pred_fallthru
      _
    // Predicated region
    $region46: #{tpu_custom_call.1} parent=1 // pred_check
      _
    $region47: #{tpu_custom_call.1} parent=1 // pred_check_branch
      %81 = sbr.rel (0) target = $region49
    $region48: #{tpu_custom_call.1} parent=1 // pred_region
      %83 = dma.done [#allocation8], 512
    $region49: #{tpu_custom_call.1} parent=1 // pred_fallthru
      _
    %v84 = vld [vmem:[%s1] sm:$0xf]
    %v85 = vld [vmem:[#allocation4] sm:$0xff]
    %v86 = vld [vmem:[#allocation4 + $0x8] sm:$0xff]
    %v87 = vld [vmem:[#allocation4 + $0x10] sm:$0xff]
    %v88 = vld [vmem:[#allocation4 + $0x18] sm:$0xff]
    %v89 = vld [vmem:[%s3] sm:$0x1]
    %v90 = vld [vmem:[%s0] sm:$0xff]
    %v91 = vld [vmem:[%s0 + $0x8] sm:$0xff]
    %v93 = vperm.slane %v89, 0
    %vm95 = vcmask 31744
    %v97 = vsel %vm95, %v90, 0
    %v100 = vsel %vm95, %v91, 0
    %vm102 = vcmask 1043456
    %v104 = vsel %vm102, %v84, 0
    %106 = vmatpush.msra.mxu0 0.0
    %107 = vmatpush.msra.mxu0 0.0
    %108 = vmatpush.msra.mxu0 0.0
    %109 = vmatpush.msra.mxu0 0.0
    %110 = vmatpush.msra.mxu0 0.0
    %111 = vmatpush.msra.mxu0 0.0
    %112 = vmatpush.msra.mxu0 0.0
    %113 = vmatpush.msra.mxu0 0.0
    %114 = vmatpush.msra.mxu0 0.0
    %115 = vmatpush.msra.mxu0 0.0
    %116 = vmatpush.msra.mxu0 0.0
    %117 = vmatpush.msra.mxu0 0.0
    %118 = vmatpush.msra.mxu0 0.0
    %119 = vmatpush.msra.mxu0 0.0
    %120 = vmatpush.msra.mxu0 0.0
    %121 = vmatpush.msra.mxu0 %v104
    %122 = vmatmul.f32.gmra.mxu0 %v97
    %v123 = vpop.f32.mrf.mxu0
    %v124 = vadd.f32 %v93, %v123
    %125 = vmatmul.f32.gmra.mxu0 %v100
    %v126 = vpop.f32.mrf.mxu0
    %v127 = vadd.f32 %v93, %v126
    %128 = vdwg.mxu0
    %129 = vst [vmem:[#allocation3] sm:$0xff] %v124
    %130 = vst [vmem:[#allocation3 + $0x8] sm:$0xff] %v127
    %v131 = vld [vmem:[%s7] sm:$0x3]
    %v132 = vld [vmem:[%s8] sm:$0x3]
    %v133 = vld [vmem:[#allocation3] sm:$0x3]
    %vm134 = vcmask 261120
    %v136 = vsel %vm134, %v131, 0
    %138 = vmatpush.msra.mxu0 0.0
    %139 = vmatpush.msra.mxu0 0.0
    %140 = vmatpush.msra.mxu0 0.0
    %141 = vmatpush.msra.mxu0 0.0
    %142 = vmatpush.msra.mxu0 0.0
    %143 = vmatpush.msra.mxu0 0.0
    %144 = vmatpush.msra.mxu0 0.0
    %145 = vmatpush.msra.mxu0 0.0
    %146 = vmatpush.msra.mxu0 0.0
    %147 = vmatpush.msra.mxu0 0.0
    %148 = vmatpush.msra.mxu0 0.0
    %149 = vmatpush.msra.mxu0 0.0
    %150 = vmatpush.msra.mxu0 %v88
    %151 = vmatpush.msra.mxu0 %v87
    %152 = vmatpush.msra.mxu0 %v86
    %153 = vmatpush.msra.mxu0 %v85
    %154 = vmatmul.f32.gmra.mxu0 %v136
    %v155 = vpop.f32.mrf.mxu0
    %v156 = vadd.f32 0.0, %v155
    %157 = vdwg.mxu0
    %v158 = vadd.f32 %v133, %v156
    %v159 = vxor.u32 %v158, 2147483648
    %v160 = vmul.f32 %v159, 1.442695
    %v161 = vpow.pop %v160
    %v162 = vadd.f32 %v161, 1.0
    %v163 = vrcp.pop %v162
    %v164 = vmul.f32 %v162, %v163
    %v165 = vsub.f32 1.0, %v164
    %v166 = vmul.f32 %v163, %v165
    %v167 = vadd.f32 %v163, %v166
    %vm168 = vweird.f32 %v162
    %vm169 = vweird.f32 %v163
    %vm170 = vmor %vm168, %vm169
    %v171 = vsel %vm170, %v163, %v167
    %v172 = vand.u32 2147483647, %v162
    %vm173 = vcmp.eq.f32.partialorder %v172, 8.507059e+37
    %v174 = vand.u32 %v162, 2147483648
    %v175 = vor.u32 1.1754944e-38, %v174
    %v176 = vsel %vm173, %v175, %v171
    %v177 = vmul.f32 1.0, %v176
    %v178 = vtanh.pop %v158
    %180 = vrot.lane.b32.xlu0 %v132, 32
    %v181 = vpop.permute.xlu0 %180
    %v183 = vmul.f32 %v177, %v181
    %185 = vrot.lane.b32.xlu0 %v178, 32
    %v186 = vpop.permute.xlu0 %185
    %v188 = vmul.f32 %v177, %v186
    %190 = vrot.lane.b32.xlu0 %v188, 32
    %v191 = vpop.permute.xlu0 %190
    %v193 = vadd.f32 %v183, %v191
    %v194 = vtanh.pop %v193
    %196 = vrot.lane.b32.xlu0 %v194, 32
    %v197 = vpop.permute.xlu0 %196
    %v199 = vmul.f32 %v177, %v197
    %201 = vrot.lane.b32.xlu0 %v199, 64
    %v202 = vpop.permute.xlu0 %201
    %vm204 = vcmask 254976
    %205 = vst.msk [vmem:[#allocation2] sm:$0x3] %vm204, %v202
    %v206 = vld [vmem:[#allocation3 + $0x2] sm:$0x3]
    %v207 = vsel %vm134, %v202, 0
    %209 = vmatpush.msra.mxu0 0.0
    %210 = vmatpush.msra.mxu0 0.0
    %211 = vmatpush.msra.mxu0 0.0
    %212 = vmatpush.msra.mxu0 0.0
    %213 = vmatpush.msra.mxu0 0.0
    %214 = vmatpush.msra.mxu0 0.0
    %215 = vmatpush.msra.mxu0 0.0
    %216 = vmatpush.msra.mxu0 0.0
    %217 = vmatpush.msra.mxu0 0.0
    %218 = vmatpush.msra.mxu0 0.0
    %219 = vmatpush.msra.mxu0 0.0
    %220 = vmatpush.msra.mxu0 0.0
    %221 = vmatpush.msra.mxu0 %v88
    %222 = vmatpush.msra.mxu0 %v87
    %223 = vmatpush.msra.mxu0 %v86
    %224 = vmatpush.msra.mxu0 %v85
    %225 = vmatmul.f32.gmra.mxu0 %v207
    %v226 = vpop.f32.mrf.mxu0
    %v227 = vadd.f32 0.0, %v226
    %228 = vdwg.mxu0
    %v229 = vadd.f32 %v206, %v227
    %v230 = vxor.u32 %v229, 2147483648
    %v231 = vmul.f32 %v230, 1.442695
    %v232 = vpow.pop %v231
    %v233 = vadd.f32 %v232, 1.0
    %v234 = vrcp.pop %v233
    %v235 = vmul.f32 %v233, %v234
    %v236 = vsub.f32 1.0, %v235
    %v237 = vmul.f32 %v234, %v236
    %v238 = vadd.f32 %v234, %v237
    %vm239 = vweird.f32 %v233
    %vm240 = vweird.f32 %v234
    %vm241 = vmor %vm239, %vm240
    %v242 = vsel %vm241, %v234, %v238
    %v243 = vand.u32 2147483647, %v233
    %vm244 = vcmp.eq.f32.partialorder %v243, 8.507059e+37
    %v245 = vand.u32 %v233, 2147483648
    %v246 = vor.u32 1.1754944e-38, %v245
    %v247 = vsel %vm244, %v246, %v242
    %v248 = vmul.f32 1.0, %v247
    %v249 = vtanh.pop %v229
    %v250 = vmul.f32 %v248, %v193
    %252 = vrot.lane.b32.xlu0 %v249, 32
    %v253 = vpop.permute.xlu0 %252
    %v255 = vmul.f32 %v248, %v253
    %257 = vrot.lane.b32.xlu0 %v255, 32
    %v258 = vpop.permute.xlu0 %257
    %v260 = vadd.f32 %v250, %v258
    %v261 = vtanh.pop %v260
    %263 = vrot.lane.b32.xlu0 %v261, 32
    %v264 = vpop.permute.xlu0 %263
    %v266 = vmul.f32 %v248, %v264
    %268 = vrot.lane.b32.xlu0 %v266, 64
    %v269 = vpop.permute.xlu0 %268
    %271 = vst.msk [vmem:[#allocation2 + $0x2] sm:$0x3] %vm204, %v269
    %v272 = vld [vmem:[#allocation3 + $0x4] sm:$0x3]
    %v273 = vsel %vm134, %v269, 0
    %275 = vmatpush.msra.mxu0 0.0
    %276 = vmatpush.msra.mxu0 0.0
    %277 = vmatpush.msra.mxu0 0.0
    %278 = vmatpush.msra.mxu0 0.0
    %279 = vmatpush.msra.mxu0 0.0
    %280 = vmatpush.msra.mxu0 0.0
    %281 = vmatpush.msra.mxu0 0.0
    %282 = vmatpush.msra.mxu0 0.0
    %283 = vmatpush.msra.mxu0 0.0
    %284 = vmatpush.msra.mxu0 0.0
    %285 = vmatpush.msra.mxu0 0.0
    %286 = vmatpush.msra.mxu0 0.0
    %287 = vmatpush.msra.mxu0 %v88
    %288 = vmatpush.msra.mxu0 %v87
    %289 = vmatpush.msra.mxu0 %v86
    %290 = vmatpush.msra.mxu0 %v85
    %291 = vmatmul.f32.gmra.mxu0 %v273
    %v292 = vpop.f32.mrf.mxu0
    %v293 = vadd.f32 0.0, %v292
    %294 = vdwg.mxu0
    %v295 = vadd.f32 %v272, %v293
    %v296 = vxor.u32 %v295, 2147483648
    %v297 = vmul.f32 %v296, 1.442695
    %v298 = vpow.pop %v297
    %v299 = vadd.f32 %v298, 1.0
    %v300 = vrcp.pop %v299
    %v301 = vmul.f32 %v299, %v300
    %v302 = vsub.f32 1.0, %v301
    %v303 = vmul.f32 %v300, %v302
    %v304 = vadd.f32 %v300, %v303
    %vm305 = vweird.f32 %v299
    %vm306 = vweird.f32 %v300
    %vm307 = vmor %vm305, %vm306
    %v308 = vsel %vm307, %v300, %v304
    %v309 = vand.u32 2147483647, %v299
    %vm310 = vcmp.eq.f32.partialorder %v309, 8.507059e+37
    %v311 = vand.u32 %v299, 2147483648
    %v312 = vor.u32 1.1754944e-38, %v311
    %v313 = vsel %vm310, %v312, %v308
    %v314 = vmul.f32 1.0, %v313
    %v315 = vtanh.pop %v295
    %v316 = vmul.f32 %v314, %v260
    %318 = vrot.lane.b32.xlu0 %v315, 32
    %v319 = vpop.permute.xlu0 %318
    %v321 = vmul.f32 %v314, %v319
    %323 = vrot.lane.b32.xlu0 %v321, 32
    %v324 = vpop.permute.xlu0 %323
    %v326 = vadd.f32 %v316, %v324
    %v327 = vtanh.pop %v326
    %329 = vrot.lane.b32.xlu0 %v327, 32
    %v330 = vpop.permute.xlu0 %329
    %v332 = vmul.f32 %v314, %v330
    %334 = vrot.lane.b32.xlu0 %v332, 64
    %v335 = vpop.permute.xlu0 %334
    %337 = vst.msk [vmem:[#allocation2 + $0x4] sm:$0x3] %vm204, %v335
    %v338 = vld [vmem:[#allocation3 + $0x6] sm:$0x3]
    %v339 = vsel %vm134, %v335, 0
    %341 = vmatpush.msra.mxu0 0.0
    %342 = vmatpush.msra.mxu0 0.0
    %343 = vmatpush.msra.mxu0 0.0
    %344 = vmatpush.msra.mxu0 0.0
    %345 = vmatpush.msra.mxu0 0.0
    %346 = vmatpush.msra.mxu0 0.0
    %347 = vmatpush.msra.mxu0 0.0
    %348 = vmatpush.msra.mxu0 0.0
    %349 = vmatpush.msra.mxu0 0.0
    %350 = vmatpush.msra.mxu0 0.0
    %351 = vmatpush.msra.mxu0 0.0
    %352 = vmatpush.msra.mxu0 0.0
    %353 = vmatpush.msra.mxu0 %v88
    %354 = vmatpush.msra.mxu0 %v87
    %355 = vmatpush.msra.mxu0 %v86
    %356 = vmatpush.msra.mxu0 %v85
    %357 = vmatmul.f32.gmra.mxu0 %v339
    %v358 = vpop.f32.mrf.mxu0
    %v359 = vadd.f32 0.0, %v358
    %360 = vdwg.mxu0
    %v361 = vadd.f32 %v338, %v359
    %v362 = vxor.u32 %v361, 2147483648
    %v363 = vmul.f32 %v362, 1.442695
    %v364 = vpow.pop %v363
    %v365 = vadd.f32 %v364, 1.0
    %v366 = vrcp.pop %v365
    %v367 = vmul.f32 %v365, %v366
    %v368 = vsub.f32 1.0, %v367
    %v369 = vmul.f32 %v366, %v368
    %v370 = vadd.f32 %v366, %v369
    %vm371 = vweird.f32 %v365
    %vm372 = vweird.f32 %v366
    %vm373 = vmor %vm371, %vm372
    %v374 = vsel %vm373, %v366, %v370
    %v375 = vand.u32 2147483647, %v365
    %vm376 = vcmp.eq.f32.partialorder %v375, 8.507059e+37
    %v377 = vand.u32 %v365, 2147483648
    %v378 = vor.u32 1.1754944e-38, %v377
    %v379 = vsel %vm376, %v378, %v374
    %v380 = vmul.f32 1.0, %v379
    %v381 = vtanh.pop %v361
    %v382 = vmul.f32 %v380, %v326
    %384 = vrot.lane.b32.xlu0 %v381, 32
    %v385 = vpop.permute.xlu0 %384
    %v387 = vmul.f32 %v380, %v385
    %389 = vrot.lane.b32.xlu0 %v387, 32
    %v390 = vpop.permute.xlu0 %389
    %v392 = vadd.f32 %v382, %v390
    %v393 = vtanh.pop %v392
    %395 = vrot.lane.b32.xlu0 %v393, 32
    %v396 = vpop.permute.xlu0 %395
    %v398 = vmul.f32 %v380, %v396
    %400 = vrot.lane.b32.xlu0 %v398, 64
    %v401 = vpop.permute.xlu0 %400
    %403 = vst.msk [vmem:[#allocation2 + $0x6] sm:$0x3] %vm204, %v401
    %v404 = vld [vmem:[#allocation3 + $0x8] sm:$0x3]
    %v405 = vsel %vm134, %v401, 0
    %407 = vmatpush.msra.mxu0 0.0
    %408 = vmatpush.msra.mxu0 0.0
    %409 = vmatpush.msra.mxu0 0.0
    %410 = vmatpush.msra.mxu0 0.0
    %411 = vmatpush.msra.mxu0 0.0
    %412 = vmatpush.msra.mxu0 0.0
    %413 = vmatpush.msra.mxu0 0.0
    %414 = vmatpush.msra.mxu0 0.0
    %415 = vmatpush.msra.mxu0 0.0
    %416 = vmatpush.msra.mxu0 0.0
    %417 = vmatpush.msra.mxu0 0.0
    %418 = vmatpush.msra.mxu0 0.0
    %419 = vmatpush.msra.mxu0 %v88
    %420 = vmatpush.msra.mxu0 %v87
    %421 = vmatpush.msra.mxu0 %v86
    %422 = vmatpush.msra.mxu0 %v85
    %423 = vmatmul.f32.gmra.mxu0 %v405
    %v424 = vpop.f32.mrf.mxu0
    %v425 = vadd.f32 0.0, %v424
    %426 = vdwg.mxu0
    %v427 = vadd.f32 %v404, %v425
    %v428 = vxor.u32 %v427, 2147483648
    %v429 = vmul.f32 %v428, 1.442695
    %v430 = vpow.pop %v429
    %v431 = vadd.f32 %v430, 1.0
    %v432 = vrcp.pop %v431
    %v433 = vmul.f32 %v431, %v432
    %v434 = vsub.f32 1.0, %v433
    %v435 = vmul.f32 %v432, %v434
    %v436 = vadd.f32 %v432, %v435
    %vm437 = vweird.f32 %v431
    %vm438 = vweird.f32 %v432
    %vm439 = vmor %vm437, %vm438
    %v440 = vsel %vm439, %v432, %v436
    %v441 = vand.u32 2147483647, %v431
    %vm442 = vcmp.eq.f32.partialorder %v441, 8.507059e+37
    %v443 = vand.u32 %v431, 2147483648
    %v444 = vor.u32 1.1754944e-38, %v443
    %v445 = vsel %vm442, %v444, %v440
    %v446 = vmul.f32 1.0, %v445
    %v447 = vtanh.pop %v427
    %v448 = vmul.f32 %v446, %v392
    %450 = vrot.lane.b32.xlu0 %v447, 32
    %v451 = vpop.permute.xlu0 %450
    %v453 = vmul.f32 %v446, %v451
    %455 = vrot.lane.b32.xlu0 %v453, 32
    %v456 = vpop.permute.xlu0 %455
    %v458 = vadd.f32 %v448, %v456
    %v459 = vtanh.pop %v458
    %461 = vrot.lane.b32.xlu0 %v459, 32
    %v462 = vpop.permute.xlu0 %461
    %v464 = vmul.f32 %v446, %v462
    %466 = vrot.lane.b32.xlu0 %v464, 64
    %v467 = vpop.permute.xlu0 %466
    %469 = vst.msk [vmem:[#allocation2 + $0x8] sm:$0x3] %vm204, %v467
    %v470 = vld [vmem:[#allocation3 + $0xa] sm:$0x3]
    %v471 = vsel %vm134, %v467, 0
    %473 = vmatpush.msra.mxu0 0.0
    %474 = vmatpush.msra.mxu0 0.0
    %475 = vmatpush.msra.mxu0 0.0
    %476 = vmatpush.msra.mxu0 0.0
    %477 = vmatpush.msra.mxu0 0.0
    %478 = vmatpush.msra.mxu0 0.0
    %479 = vmatpush.msra.mxu0 0.0
    %480 = vmatpush.msra.mxu0 0.0
    %481 = vmatpush.msra.mxu0 0.0
    %482 = vmatpush.msra.mxu0 0.0
    %483 = vmatpush.msra.mxu0 0.0
    %484 = vmatpush.msra.mxu0 0.0
    %485 = vmatpush.msra.mxu0 %v88
    %486 = vmatpush.msra.mxu0 %v87
    %487 = vmatpush.msra.mxu0 %v86
    %488 = vmatpush.msra.mxu0 %v85
    %489 = vmatmul.f32.gmra.mxu0 %v471
    %v490 = vpop.f32.mrf.mxu0
    %v491 = vadd.f32 0.0, %v490
    %492 = vdwg.mxu0
    %v493 = vadd.f32 %v470, %v491
    %v494 = vxor.u32 %v493, 2147483648
    %v495 = vmul.f32 %v494, 1.442695
    %v496 = vpow.pop %v495
    %v497 = vadd.f32 %v496, 1.0
    %v498 = vrcp.pop %v497
    %v499 = vmul.f32 %v497, %v498
    %v500 = vsub.f32 1.0, %v499
    %v501 = vmul.f32 %v498, %v500
    %v502 = vadd.f32 %v498, %v501
    %vm503 = vweird.f32 %v497
    %vm504 = vweird.f32 %v498
    %vm505 = vmor %vm503, %vm504
    %v506 = vsel %vm505, %v498, %v502
    %v507 = vand.u32 2147483647, %v497
    %vm508 = vcmp.eq.f32.partialorder %v507, 8.507059e+37
    %v509 = vand.u32 %v497, 2147483648
    %v510 = vor.u32 1.1754944e-38, %v509
    %v511 = vsel %vm508, %v510, %v506
    %v512 = vmul.f32 1.0, %v511
    %v513 = vtanh.pop %v493
    %v514 = vmul.f32 %v512, %v458
    %516 = vrot.lane.b32.xlu0 %v513, 32
    %v517 = vpop.permute.xlu0 %516
    %v519 = vmul.f32 %v512, %v517
    %521 = vrot.lane.b32.xlu0 %v519, 32
    %v522 = vpop.permute.xlu0 %521
    %v524 = vadd.f32 %v514, %v522
    %v525 = vtanh.pop %v524
    %527 = vrot.lane.b32.xlu0 %v525, 32
    %v528 = vpop.permute.xlu0 %527
    %v530 = vmul.f32 %v512, %v528
    %532 = vrot.lane.b32.xlu0 %v530, 64
    %v533 = vpop.permute.xlu0 %532
    %535 = vst.msk [vmem:[#allocation2 + $0xa] sm:$0x3] %vm204, %v533
    %v536 = vld [vmem:[#allocation3 + $0xc] sm:$0x3]
    %v537 = vsel %vm134, %v533, 0
    %539 = vmatpush.msra.mxu0 0.0
    %540 = vmatpush.msra.mxu0 0.0
    %541 = vmatpush.msra.mxu0 0.0
    %542 = vmatpush.msra.mxu0 0.0
    %543 = vmatpush.msra.mxu0 0.0
    %544 = vmatpush.msra.mxu0 0.0
    %545 = vmatpush.msra.mxu0 0.0
    %546 = vmatpush.msra.mxu0 0.0
    %547 = vmatpush.msra.mxu0 0.0
    %548 = vmatpush.msra.mxu0 0.0
    %549 = vmatpush.msra.mxu0 0.0
    %550 = vmatpush.msra.mxu0 0.0
    %551 = vmatpush.msra.mxu0 %v88
    %552 = vmatpush.msra.mxu0 %v87
    %553 = vmatpush.msra.mxu0 %v86
    %554 = vmatpush.msra.mxu0 %v85
    %555 = vmatmul.f32.gmra.mxu0 %v537
    %v556 = vpop.f32.mrf.mxu0
    %v557 = vadd.f32 0.0, %v556
    %558 = vdwg.mxu0
    %v559 = vadd.f32 %v536, %v557
    %v560 = vxor.u32 %v559, 2147483648
    %v561 = vmul.f32 %v560, 1.442695
    %v562 = vpow.pop %v561
    %v563 = vadd.f32 %v562, 1.0
    %v564 = vrcp.pop %v563
    %v565 = vmul.f32 %v563, %v564
    %v566 = vsub.f32 1.0, %v565
    %v567 = vmul.f32 %v564, %v566
    %v568 = vadd.f32 %v564, %v567
    %vm569 = vweird.f32 %v563
    %vm570 = vweird.f32 %v564
    %vm571 = vmor %vm569, %vm570
    %v572 = vsel %vm571, %v564, %v568
    %v573 = vand.u32 2147483647, %v563
    %vm574 = vcmp.eq.f32.partialorder %v573, 8.507059e+37
    %v575 = vand.u32 %v563, 2147483648
    %v576 = vor.u32 1.1754944e-38, %v575
    %v577 = vsel %vm574, %v576, %v572
    %v578 = vmul.f32 1.0, %v577
    %v579 = vtanh.pop %v559
    %v580 = vmul.f32 %v578, %v524
    %582 = vrot.lane.b32.xlu0 %v579, 32
    %v583 = vpop.permute.xlu0 %582
    %v585 = vmul.f32 %v578, %v583
    %587 = vrot.lane.b32.xlu0 %v585, 32
    %v588 = vpop.permute.xlu0 %587
    %v590 = vadd.f32 %v580, %v588
    %v591 = vtanh.pop %v590
    %593 = vrot.lane.b32.xlu0 %v591, 32
    %v594 = vpop.permute.xlu0 %593
    %v596 = vmul.f32 %v578, %v594
    %598 = vrot.lane.b32.xlu0 %v596, 64
    %v599 = vpop.permute.xlu0 %598
    %601 = vst.msk [vmem:[#allocation2 + $0xc] sm:$0x3] %vm204, %v599
    %v602 = vld [vmem:[#allocation3 + $0xe] sm:$0x3]
    %v603 = vsel %vm134, %v599, 0
    %605 = vmatpush.msra.mxu0 0.0
    %606 = vmatpush.msra.mxu0 0.0
    %607 = vmatpush.msra.mxu0 0.0
    %608 = vmatpush.msra.mxu0 0.0
    %609 = vmatpush.msra.mxu0 0.0
    %610 = vmatpush.msra.mxu0 0.0
    %611 = vmatpush.msra.mxu0 0.0
    %612 = vmatpush.msra.mxu0 0.0
    %613 = vmatpush.msra.mxu0 0.0
    %614 = vmatpush.msra.mxu0 0.0
    %615 = vmatpush.msra.mxu0 0.0
    %616 = vmatpush.msra.mxu0 0.0
    %617 = vmatpush.msra.mxu0 %v88
    %618 = vmatpush.msra.mxu0 %v87
    %619 = vmatpush.msra.mxu0 %v86
    %620 = vmatpush.msra.mxu0 %v85
    %621 = vmatmul.f32.gmra.mxu0 %v603
    %v622 = vpop.f32.mrf.mxu0
    %v623 = vadd.f32 0.0, %v622
    %624 = vdwg.mxu0
    %v625 = vadd.f32 %v602, %v623
    %v626 = vxor.u32 %v625, 2147483648
    %v627 = vmul.f32 %v626, 1.442695
    %v628 = vpow.pop %v627
    %v629 = vadd.f32 %v628, 1.0
    %v630 = vrcp.pop %v629
    %v631 = vmul.f32 %v629, %v630
    %v632 = vsub.f32 1.0, %v631
    %v633 = vmul.f32 %v630, %v632
    %v634 = vadd.f32 %v630, %v633
    %vm635 = vweird.f32 %v629
    %vm636 = vweird.f32 %v630
    %vm637 = vmor %vm635, %vm636
    %v638 = vsel %vm637, %v630, %v634
    %v639 = vand.u32 2147483647, %v629
    %vm640 = vcmp.eq.f32.partialorder %v639, 8.507059e+37
    %v641 = vand.u32 %v629, 2147483648
    %v642 = vor.u32 1.1754944e-38, %v641
    %v643 = vsel %vm640, %v642, %v638
    %v644 = vmul.f32 1.0, %v643
    %v645 = vtanh.pop %v625
    %v646 = vmul.f32 %v644, %v590
    %648 = vrot.lane.b32.xlu0 %v645, 32
    %v649 = vpop.permute.xlu0 %648
    %v651 = vmul.f32 %v644, %v649
    %653 = vrot.lane.b32.xlu0 %v651, 32
    %v654 = vpop.permute.xlu0 %653
    %v656 = vadd.f32 %v646, %v654
    %v657 = vtanh.pop %v656
    %659 = vrot.lane.b32.xlu0 %v657, 32
    %v660 = vpop.permute.xlu0 %659
    %v662 = vmul.f32 %v644, %v660
    %664 = vrot.lane.b32.xlu0 %v662, 64
    %v665 = vpop.permute.xlu0 %664
    %667 = vst.msk [vmem:[#allocation2 + $0xe] sm:$0x3] %vm204, %v665
    %668 = vst.msk [vmem:[#allocation11] sm:$0x3] %vm204, %v665
    %670 = vrot.lane.b32.xlu0 %v656, 96
    %v671 = vpop.permute.xlu0 %670
    %673 = vst.msk [vmem:[#allocation13] sm:$0x3] %vm204, %v671
    %v674 = vld [vmem:[#allocation7] sm:$0xff]
    %v675 = vld [vmem:[#allocation7 + $0x8] sm:$0xff]
    %v676 = vld [vmem:[#allocation7 + $0x10] sm:$0xff]
    %v677 = vld [vmem:[#allocation7 + $0x18] sm:$0xff]
    %v678 = vld [vmem:[#allocation9] sm:$0xff]
    %v679 = vld [vmem:[#allocation9 + $0x8] sm:$0xff]
    %v680 = vld [vmem:[#allocation9 + $0x10] sm:$0xff]
    %v681 = vld [vmem:[#allocation9 + $0x18] sm:$0xff]
    %v682 = vld [vmem:[%s6] sm:$0x1]
    %v683 = vld [vmem:[#allocation2] sm:$0xff]
    %v684 = vld [vmem:[#allocation2 + $0x8] sm:$0xff]
    %v686 = vperm.slane %v682, 0
    %v689 = vsel %vm134, %v683, 0
    %v692 = vsel %vm134, %v684, 0
    %694 = vmatpush.msra.mxu0 0.0
    %695 = vmatpush.msra.mxu0 0.0
    %696 = vmatpush.msra.mxu0 0.0
    %697 = vmatpush.msra.mxu0 0.0
    %698 = vmatpush.msra.mxu0 0.0
    %699 = vmatpush.msra.mxu0 0.0
    %700 = vmatpush.msra.mxu0 0.0
    %701 = vmatpush.msra.mxu0 0.0
    %702 = vmatpush.msra.mxu0 0.0
    %703 = vmatpush.msra.mxu0 0.0
    %704 = vmatpush.msra.mxu0 0.0
    %705 = vmatpush.msra.mxu0 0.0
    %706 = vmatpush.msra.mxu0 %v677
    %707 = vmatpush.msra.mxu0 %v676
    %708 = vmatpush.msra.mxu0 %v675
    %709 = vmatpush.msra.mxu0 %v674
    %710 = vmatmul.f32.gmra.mxu0 %v689
    %v711 = vpop.f32.mrf.mxu0
    %v712 = vadd.f32 %v686, %v711
    %713 = vmatmul.f32.gmra.mxu0 %v692
    %v714 = vpop.f32.mrf.mxu0
    %v715 = vadd.f32 %v686, %v714
    %716 = vdwg.mxu0
    %717 = vst [vmem:[#allocation3] sm:$0xff] %v712
    %718 = vst [vmem:[#allocation3 + $0x8] sm:$0xff] %v715
    %s719 = scalar_lea.vmem %s7, 2
    %v720 = vld [vmem:[%s719] sm:$0x3]
    %s721 = scalar_lea.vmem %s8, 2
    %v722 = vld [vmem:[%s721] sm:$0x3]
    %v723 = vld [vmem:[#allocation3] sm:$0x3]
    %v725 = vsel %vm134, %v720, 0
    %727 = vmatpush.msra.mxu0 0.0
    %728 = vmatpush.msra.mxu0 0.0
    %729 = vmatpush.msra.mxu0 0.0
    %730 = vmatpush.msra.mxu0 0.0
    %731 = vmatpush.msra.mxu0 0.0
    %732 = vmatpush.msra.mxu0 0.0
    %733 = vmatpush.msra.mxu0 0.0
    %734 = vmatpush.msra.mxu0 0.0
    %735 = vmatpush.msra.mxu0 0.0
    %736 = vmatpush.msra.mxu0 0.0
    %737 = vmatpush.msra.mxu0 0.0
    %738 = vmatpush.msra.mxu0 0.0
    %739 = vmatpush.msra.mxu0 %v681
    %740 = vmatpush.msra.mxu0 %v680
    %741 = vmatpush.msra.mxu0 %v679
    %742 = vmatpush.msra.mxu0 %v678
    %743 = vmatmul.f32.gmra.mxu0 %v725
    %v744 = vpop.f32.mrf.mxu0
    %v745 = vadd.f32 0.0, %v744
    %746 = vdwg.mxu0
    %v747 = vadd.f32 %v723, %v745
    %v748 = vxor.u32 %v747, 2147483648
    %v749 = vmul.f32 %v748, 1.442695
    %v750 = vpow.pop %v749
    %v751 = vadd.f32 %v750, 1.0
    %v752 = vrcp.pop %v751
    %v753 = vmul.f32 %v751, %v752
    %v754 = vsub.f32 1.0, %v753
    %v755 = vmul.f32 %v752, %v754
    %v756 = vadd.f32 %v752, %v755
    %vm757 = vweird.f32 %v751
    %vm758 = vweird.f32 %v752
    %vm759 = vmor %vm757, %vm758
    %v760 = vsel %vm759, %v752, %v756
    %v761 = vand.u32 2147483647, %v751
    %vm762 = vcmp.eq.f32.partialorder %v761, 8.507059e+37
    %v763 = vand.u32 %v751, 2147483648
    %v764 = vor.u32 1.1754944e-38, %v763
    %v765 = vsel %vm762, %v764, %v760
    %v766 = vmul.f32 1.0, %v765
    %v767 = vtanh.pop %v747
    %769 = vrot.lane.b32.xlu0 %v722, 32
    %v770 = vpop.permute.xlu0 %769
    %v772 = vmul.f32 %v766, %v770
    %774 = vrot.lane.b32.xlu0 %v767, 32
    %v775 = vpop.permute.xlu0 %774
    %v777 = vmul.f32 %v766, %v775
    %779 = vrot.lane.b32.xlu0 %v777, 32
    %v780 = vpop.permute.xlu0 %779
    %v782 = vadd.f32 %v772, %v780
    %v783 = vtanh.pop %v782
    %785 = vrot.lane.b32.xlu0 %v783, 32
    %v786 = vpop.permute.xlu0 %785
    %v788 = vmul.f32 %v766, %v786
    %790 = vrot.lane.b32.xlu0 %v788, 64
    %v791 = vpop.permute.xlu0 %790
    %793 = vst.msk [vmem:[#allocation2] sm:$0x3] %vm204, %v791
    %v794 = vld [vmem:[#allocation3 + $0x2] sm:$0x3]
    %v795 = vsel %vm134, %v791, 0
    %797 = vmatpush.msra.mxu0 0.0
    %798 = vmatpush.msra.mxu0 0.0
    %799 = vmatpush.msra.mxu0 0.0
    %800 = vmatpush.msra.mxu0 0.0
    %801 = vmatpush.msra.mxu0 0.0
    %802 = vmatpush.msra.mxu0 0.0
    %803 = vmatpush.msra.mxu0 0.0
    %804 = vmatpush.msra.mxu0 0.0
    %805 = vmatpush.msra.mxu0 0.0
    %806 = vmatpush.msra.mxu0 0.0
    %807 = vmatpush.msra.mxu0 0.0
    %808 = vmatpush.msra.mxu0 0.0
    %809 = vmatpush.msra.mxu0 %v681
    %810 = vmatpush.msra.mxu0 %v680
    %811 = vmatpush.msra.mxu0 %v679
    %812 = vmatpush.msra.mxu0 %v678
    %813 = vmatmul.f32.gmra.mxu0 %v795
    %v814 = vpop.f32.mrf.mxu0
    %v815 = vadd.f32 0.0, %v814
    %816 = vdwg.mxu0
    %v817 = vadd.f32 %v794, %v815
    %v818 = vxor.u32 %v817, 2147483648
    %v819 = vmul.f32 %v818, 1.442695
    %v820 = vpow.pop %v819
    %v821 = vadd.f32 %v820, 1.0
    %v822 = vrcp.pop %v821
    %v823 = vmul.f32 %v821, %v822
    %v824 = vsub.f32 1.0, %v823
    %v825 = vmul.f32 %v822, %v824
    %v826 = vadd.f32 %v822, %v825
    %vm827 = vweird.f32 %v821
    %vm828 = vweird.f32 %v822
    %vm829 = vmor %vm827, %vm828
    %v830 = vsel %vm829, %v822, %v826
    %v831 = vand.u32 2147483647, %v821
    %vm832 = vcmp.eq.f32.partialorder %v831, 8.507059e+37
    %v833 = vand.u32 %v821, 2147483648
    %v834 = vor.u32 1.1754944e-38, %v833
    %v835 = vsel %vm832, %v834, %v830
    %v836 = vmul.f32 1.0, %v835
    %v837 = vtanh.pop %v817
    %v838 = vmul.f32 %v836, %v782
    %840 = vrot.lane.b32.xlu0 %v837, 32
    %v841 = vpop.permute.xlu0 %840
    %v843 = vmul.f32 %v836, %v841
    %845 = vrot.lane.b32.xlu0 %v843, 32
    %v846 = vpop.permute.xlu0 %845
    %v848 = vadd.f32 %v838, %v846
    %v849 = vtanh.pop %v848
    %851 = vrot.lane.b32.xlu0 %v849, 32
    %v852 = vpop.permute.xlu0 %851
    %v854 = vmul.f32 %v836, %v852
    %856 = vrot.lane.b32.xlu0 %v854, 64
    %v857 = vpop.permute.xlu0 %856
    %859 = vst.msk [vmem:[#allocation2 + $0x2] sm:$0x3] %vm204, %v857
    %v860 = vld [vmem:[#allocation3 + $0x4] sm:$0x3]
    %v861 = vsel %vm134, %v857, 0
    %863 = vmatpush.msra.mxu0 0.0
    %864 = vmatpush.msra.mxu0 0.0
    %865 = vmatpush.msra.mxu0 0.0
    %866 = vmatpush.msra.mxu0 0.0
    %867 = vmatpush.msra.mxu0 0.0
    %868 = vmatpush.msra.mxu0 0.0
    %869 = vmatpush.msra.mxu0 0.0
    %870 = vmatpush.msra.mxu0 0.0
    %871 = vmatpush.msra.mxu0 0.0
    %872 = vmatpush.msra.mxu0 0.0
    %873 = vmatpush.msra.mxu0 0.0
    %874 = vmatpush.msra.mxu0 0.0
    %875 = vmatpush.msra.mxu0 %v681
    %876 = vmatpush.msra.mxu0 %v680
    %877 = vmatpush.msra.mxu0 %v679
    %878 = vmatpush.msra.mxu0 %v678
    %879 = vmatmul.f32.gmra.mxu0 %v861
    %v880 = vpop.f32.mrf.mxu0
    %v881 = vadd.f32 0.0, %v880
    %882 = vdwg.mxu0
    %v883 = vadd.f32 %v860, %v881
    %v884 = vxor.u32 %v883, 2147483648
    %v885 = vmul.f32 %v884, 1.442695
    %v886 = vpow.pop %v885
    %v887 = vadd.f32 %v886, 1.0
    %v888 = vrcp.pop %v887
    %v889 = vmul.f32 %v887, %v888
    %v890 = vsub.f32 1.0, %v889
    %v891 = vmul.f32 %v888, %v890
    %v892 = vadd.f32 %v888, %v891
    %vm893 = vweird.f32 %v887
    %vm894 = vweird.f32 %v888
    %vm895 = vmor %vm893, %vm894
    %v896 = vsel %vm895, %v888, %v892
    %v897 = vand.u32 2147483647, %v887
    %vm898 = vcmp.eq.f32.partialorder %v897, 8.507059e+37
    %v899 = vand.u32 %v887, 2147483648
    %v900 = vor.u32 1.1754944e-38, %v899
    %v901 = vsel %vm898, %v900, %v896
    %v902 = vmul.f32 1.0, %v901
    %v903 = vtanh.pop %v883
    %v904 = vmul.f32 %v902, %v848
    %906 = vrot.lane.b32.xlu0 %v903, 32
    %v907 = vpop.permute.xlu0 %906
    %v909 = vmul.f32 %v902, %v907
    %911 = vrot.lane.b32.xlu0 %v909, 32
    %v912 = vpop.permute.xlu0 %911
    %v914 = vadd.f32 %v904, %v912
    %v915 = vtanh.pop %v914
    %917 = vrot.lane.b32.xlu0 %v915, 32
    %v918 = vpop.permute.xlu0 %917
    %v920 = vmul.f32 %v902, %v918
    %922 = vrot.lane.b32.xlu0 %v920, 64
    %v923 = vpop.permute.xlu0 %922
    %925 = vst.msk [vmem:[#allocation2 + $0x4] sm:$0x3] %vm204, %v923
    %v926 = vld [vmem:[#allocation3 + $0x6] sm:$0x3]
    %v927 = vsel %vm134, %v923, 0
    %929 = vmatpush.msra.mxu0 0.0
    %930 = vmatpush.msra.mxu0 0.0
    %931 = vmatpush.msra.mxu0 0.0
    %932 = vmatpush.msra.mxu0 0.0
    %933 = vmatpush.msra.mxu0 0.0
    %934 = vmatpush.msra.mxu0 0.0
    %935 = vmatpush.msra.mxu0 0.0
    %936 = vmatpush.msra.mxu0 0.0
    %937 = vmatpush.msra.mxu0 0.0
    %938 = vmatpush.msra.mxu0 0.0
    %939 = vmatpush.msra.mxu0 0.0
    %940 = vmatpush.msra.mxu0 0.0
    %941 = vmatpush.msra.mxu0 %v681
    %942 = vmatpush.msra.mxu0 %v680
    %943 = vmatpush.msra.mxu0 %v679
    %944 = vmatpush.msra.mxu0 %v678
    %945 = vmatmul.f32.gmra.mxu0 %v927
    %v946 = vpop.f32.mrf.mxu0
    %v947 = vadd.f32 0.0, %v946
    %948 = vdwg.mxu0
    %v949 = vadd.f32 %v926, %v947
    %v950 = vxor.u32 %v949, 2147483648
    %v951 = vmul.f32 %v950, 1.442695
    %v952 = vpow.pop %v951
    %v953 = vadd.f32 %v952, 1.0
    %v954 = vrcp.pop %v953
    %v955 = vmul.f32 %v953, %v954
    %v956 = vsub.f32 1.0, %v955
    %v957 = vmul.f32 %v954, %v956
    %v958 = vadd.f32 %v954, %v957
    %vm959 = vweird.f32 %v953
    %vm960 = vweird.f32 %v954
    %vm961 = vmor %vm959, %vm960
    %v962 = vsel %vm961, %v954, %v958
    %v963 = vand.u32 2147483647, %v953
    %vm964 = vcmp.eq.f32.partialorder %v963, 8.507059e+37
    %v965 = vand.u32 %v953, 2147483648
    %v966 = vor.u32 1.1754944e-38, %v965
    %v967 = vsel %vm964, %v966, %v962
    %v968 = vmul.f32 1.0, %v967
    %v969 = vtanh.pop %v949
    %v970 = vmul.f32 %v968, %v914
    %972 = vrot.lane.b32.xlu0 %v969, 32
    %v973 = vpop.permute.xlu0 %972
    %v975 = vmul.f32 %v968, %v973
    %977 = vrot.lane.b32.xlu0 %v975, 32
    %v978 = vpop.permute.xlu0 %977
    %v980 = vadd.f32 %v970, %v978
    %v981 = vtanh.pop %v980
    %983 = vrot.lane.b32.xlu0 %v981, 32
    %v984 = vpop.permute.xlu0 %983
    %v986 = vmul.f32 %v968, %v984
    %988 = vrot.lane.b32.xlu0 %v986, 64
    %v989 = vpop.permute.xlu0 %988
    %991 = vst.msk [vmem:[#allocation2 + $0x6] sm:$0x3] %vm204, %v989
    %v992 = vld [vmem:[#allocation3 + $0x8] sm:$0x3]
    %v993 = vsel %vm134, %v989, 0
    %995 = vmatpush.msra.mxu0 0.0
    %996 = vmatpush.msra.mxu0 0.0
    %997 = vmatpush.msra.mxu0 0.0
    %998 = vmatpush.msra.mxu0 0.0
    %999 = vmatpush.msra.mxu0 0.0
    %1000 = vmatpush.msra.mxu0 0.0
    %1001 = vmatpush.msra.mxu0 0.0
    %1002 = vmatpush.msra.mxu0 0.0
    %1003 = vmatpush.msra.mxu0 0.0
    %1004 = vmatpush.msra.mxu0 0.0
    %1005 = vmatpush.msra.mxu0 0.0
    %1006 = vmatpush.msra.mxu0 0.0
    %1007 = vmatpush.msra.mxu0 %v681
    %1008 = vmatpush.msra.mxu0 %v680
    %1009 = vmatpush.msra.mxu0 %v679
    %1010 = vmatpush.msra.mxu0 %v678
    %1011 = vmatmul.f32.gmra.mxu0 %v993
    %v1012 = vpop.f32.mrf.mxu0
    %v1013 = vadd.f32 0.0, %v1012
    %1014 = vdwg.mxu0
    %v1015 = vadd.f32 %v992, %v1013
    %v1016 = vxor.u32 %v1015, 2147483648
    %v1017 = vmul.f32 %v1016, 1.442695
    %v1018 = vpow.pop %v1017
    %v1019 = vadd.f32 %v1018, 1.0
    %v1020 = vrcp.pop %v1019
    %v1021 = vmul.f32 %v1019, %v1020
    %v1022 = vsub.f32 1.0, %v1021
    %v1023 = vmul.f32 %v1020, %v1022
    %v1024 = vadd.f32 %v1020, %v1023
    %vm1025 = vweird.f32 %v1019
    %vm1026 = vweird.f32 %v1020
    %vm1027 = vmor %vm1025, %vm1026
    %v1028 = vsel %vm1027, %v1020, %v1024
    %v1029 = vand.u32 2147483647, %v1019
    %vm1030 = vcmp.eq.f32.partialorder %v1029, 8.507059e+37
    %v1031 = vand.u32 %v1019, 2147483648
    %v1032 = vor.u32 1.1754944e-38, %v1031
    %v1033 = vsel %vm1030, %v1032, %v1028
    %v1034 = vmul.f32 1.0, %v1033
    %v1035 = vtanh.pop %v1015
    %v1036 = vmul.f32 %v1034, %v980
    %1038 = vrot.lane.b32.xlu0 %v1035, 32
    %v1039 = vpop.permute.xlu0 %1038
    %v1041 = vmul.f32 %v1034, %v1039
    %1043 = vrot.lane.b32.xlu0 %v1041, 32
    %v1044 = vpop.permute.xlu0 %1043
    %v1046 = vadd.f32 %v1036, %v1044
    %v1047 = vtanh.pop %v1046
    %1049 = vrot.lane.b32.xlu0 %v1047, 32
    %v1050 = vpop.permute.xlu0 %1049
    %v1052 = vmul.f32 %v1034, %v1050
    %1054 = vrot.lane.b32.xlu0 %v1052, 64
    %v1055 = vpop.permute.xlu0 %1054
    %1057 = vst.msk [vmem:[#allocation2 + $0x8] sm:$0x3] %vm204, %v1055
    %v1058 = vld [vmem:[#allocation3 + $0xa] sm:$0x3]
    %v1059 = vsel %vm134, %v1055, 0
    %1061 = vmatpush.msra.mxu0 0.0
    %1062 = vmatpush.msra.mxu0 0.0
    %1063 = vmatpush.msra.mxu0 0.0
    %1064 = vmatpush.msra.mxu0 0.0
    %1065 = vmatpush.msra.mxu0 0.0
    %1066 = vmatpush.msra.mxu0 0.0
    %1067 = vmatpush.msra.mxu0 0.0
    %1068 = vmatpush.msra.mxu0 0.0
    %1069 = vmatpush.msra.mxu0 0.0
    %1070 = vmatpush.msra.mxu0 0.0
    %1071 = vmatpush.msra.mxu0 0.0
    %1072 = vmatpush.msra.mxu0 0.0
    %1073 = vmatpush.msra.mxu0 %v681
    %1074 = vmatpush.msra.mxu0 %v680
    %1075 = vmatpush.msra.mxu0 %v679
    %1076 = vmatpush.msra.mxu0 %v678
    %1077 = vmatmul.f32.gmra.mxu0 %v1059
    %v1078 = vpop.f32.mrf.mxu0
    %v1079 = vadd.f32 0.0, %v1078
    %1080 = vdwg.mxu0
    %v1081 = vadd.f32 %v1058, %v1079
    %v1082 = vxor.u32 %v1081, 2147483648
    %v1083 = vmul.f32 %v1082, 1.442695
    %v1084 = vpow.pop %v1083
    %v1085 = vadd.f32 %v1084, 1.0
    %v1086 = vrcp.pop %v1085
    %v1087 = vmul.f32 %v1085, %v1086
    %v1088 = vsub.f32 1.0, %v1087
    %v1089 = vmul.f32 %v1086, %v1088
    %v1090 = vadd.f32 %v1086, %v1089
    %vm1091 = vweird.f32 %v1085
    %vm1092 = vweird.f32 %v1086
    %vm1093 = vmor %vm1091, %vm1092
    %v1094 = vsel %vm1093, %v1086, %v1090
    %v1095 = vand.u32 2147483647, %v1085
    %vm1096 = vcmp.eq.f32.partialorder %v1095, 8.507059e+37
    %v1097 = vand.u32 %v1085, 2147483648
    %v1098 = vor.u32 1.1754944e-38, %v1097
    %v1099 = vsel %vm1096, %v1098, %v1094
    %v1100 = vmul.f32 1.0, %v1099
    %v1101 = vtanh.pop %v1081
    %v1102 = vmul.f32 %v1100, %v1046
    %1104 = vrot.lane.b32.xlu0 %v1101, 32
    %v1105 = vpop.permute.xlu0 %1104
    %v1107 = vmul.f32 %v1100, %v1105
    %1109 = vrot.lane.b32.xlu0 %v1107, 32
    %v1110 = vpop.permute.xlu0 %1109
    %v1112 = vadd.f32 %v1102, %v1110
    %v1113 = vtanh.pop %v1112
    %1115 = vrot.lane.b32.xlu0 %v1113, 32
    %v1116 = vpop.permute.xlu0 %1115
    %v1118 = vmul.f32 %v1100, %v1116
    %1120 = vrot.lane.b32.xlu0 %v1118, 64
    %v1121 = vpop.permute.xlu0 %1120
    %1123 = vst.msk [vmem:[#allocation2 + $0xa] sm:$0x3] %vm204, %v1121
    %v1124 = vld [vmem:[#allocation3 + $0xc] sm:$0x3]
    %v1125 = vsel %vm134, %v1121, 0
    %1127 = vmatpush.msra.mxu0 0.0
    %1128 = vmatpush.msra.mxu0 0.0
    %1129 = vmatpush.msra.mxu0 0.0
    %1130 = vmatpush.msra.mxu0 0.0
    %1131 = vmatpush.msra.mxu0 0.0
    %1132 = vmatpush.msra.mxu0 0.0
    %1133 = vmatpush.msra.mxu0 0.0
    %1134 = vmatpush.msra.mxu0 0.0
    %1135 = vmatpush.msra.mxu0 0.0
    %1136 = vmatpush.msra.mxu0 0.0
    %1137 = vmatpush.msra.mxu0 0.0
    %1138 = vmatpush.msra.mxu0 0.0
    %1139 = vmatpush.msra.mxu0 %v681
    %1140 = vmatpush.msra.mxu0 %v680
    %1141 = vmatpush.msra.mxu0 %v679
    %1142 = vmatpush.msra.mxu0 %v678
    %1143 = vmatmul.f32.gmra.mxu0 %v1125
    %v1144 = vpop.f32.mrf.mxu0
    %v1145 = vadd.f32 0.0, %v1144
    %1146 = vdwg.mxu0
    %v1147 = vadd.f32 %v1124, %v1145
    %v1148 = vxor.u32 %v1147, 2147483648
    %v1149 = vmul.f32 %v1148, 1.442695
    %v1150 = vpow.pop %v1149
    %v1151 = vadd.f32 %v1150, 1.0
    %v1152 = vrcp.pop %v1151
    %v1153 = vmul.f32 %v1151, %v1152
    %v1154 = vsub.f32 1.0, %v1153
    %v1155 = vmul.f32 %v1152, %v1154
    %v1156 = vadd.f32 %v1152, %v1155
    %vm1157 = vweird.f32 %v1151
    %vm1158 = vweird.f32 %v1152
    %vm1159 = vmor %vm1157, %vm1158
    %v1160 = vsel %vm1159, %v1152, %v1156
    %v1161 = vand.u32 2147483647, %v1151
    %vm1162 = vcmp.eq.f32.partialorder %v1161, 8.507059e+37
    %v1163 = vand.u32 %v1151, 2147483648
    %v1164 = vor.u32 1.1754944e-38, %v1163
    %v1165 = vsel %vm1162, %v1164, %v1160
    %v1166 = vmul.f32 1.0, %v1165
    %v1167 = vtanh.pop %v1147
    %v1168 = vmul.f32 %v1166, %v1112
    %1170 = vrot.lane.b32.xlu0 %v1167, 32
    %v1171 = vpop.permute.xlu0 %1170
    %v1173 = vmul.f32 %v1166, %v1171
    %1175 = vrot.lane.b32.xlu0 %v1173, 32
    %v1176 = vpop.permute.xlu0 %1175
    %v1178 = vadd.f32 %v1168, %v1176
    %v1179 = vtanh.pop %v1178
    %1181 = vrot.lane.b32.xlu0 %v1179, 32
    %v1182 = vpop.permute.xlu0 %1181
    %v1184 = vmul.f32 %v1166, %v1182
    %1186 = vrot.lane.b32.xlu0 %v1184, 64
    %v1187 = vpop.permute.xlu0 %1186
    %1189 = vst.msk [vmem:[#allocation2 + $0xc] sm:$0x3] %vm204, %v1187
    %v1190 = vld [vmem:[#allocation3 + $0xe] sm:$0x3]
    %v1191 = vsel %vm134, %v1187, 0
    %1193 = vmatpush.msra.mxu0 0.0
    %1194 = vmatpush.msra.mxu0 0.0
    %1195 = vmatpush.msra.mxu0 0.0
    %1196 = vmatpush.msra.mxu0 0.0
    %1197 = vmatpush.msra.mxu0 0.0
    %1198 = vmatpush.msra.mxu0 0.0
    %1199 = vmatpush.msra.mxu0 0.0
    %1200 = vmatpush.msra.mxu0 0.0
    %1201 = vmatpush.msra.mxu0 0.0
    %1202 = vmatpush.msra.mxu0 0.0
    %1203 = vmatpush.msra.mxu0 0.0
    %1204 = vmatpush.msra.mxu0 0.0
    %1205 = vmatpush.msra.mxu0 %v681
    %1206 = vmatpush.msra.mxu0 %v680
    %1207 = vmatpush.msra.mxu0 %v679
    %1208 = vmatpush.msra.mxu0 %v678
    %1209 = vmatmul.f32.gmra.mxu0 %v1191
    %v1210 = vpop.f32.mrf.mxu0
    %v1211 = vadd.f32 0.0, %v1210
    %1212 = vdwg.mxu0
    %v1213 = vadd.f32 %v1190, %v1211
    %v1214 = vxor.u32 %v1213, 2147483648
    %v1215 = vmul.f32 %v1214, 1.442695
    %v1216 = vpow.pop %v1215
    %v1217 = vadd.f32 %v1216, 1.0
    %v1218 = vrcp.pop %v1217
    %v1219 = vmul.f32 %v1217, %v1218
    %v1220 = vsub.f32 1.0, %v1219
    %v1221 = vmul.f32 %v1218, %v1220
    %v1222 = vadd.f32 %v1218, %v1221
    %vm1223 = vweird.f32 %v1217
    %vm1224 = vweird.f32 %v1218
    %vm1225 = vmor %vm1223, %vm1224
    %v1226 = vsel %vm1225, %v1218, %v1222
    %v1227 = vand.u32 2147483647, %v1217
    %vm1228 = vcmp.eq.f32.partialorder %v1227, 8.507059e+37
    %v1229 = vand.u32 %v1217, 2147483648
    %v1230 = vor.u32 1.1754944e-38, %v1229
    %v1231 = vsel %vm1228, %v1230, %v1226
    %v1232 = vmul.f32 1.0, %v1231
    %v1233 = vtanh.pop %v1213
    %v1234 = vmul.f32 %v1232, %v1178
    %1236 = vrot.lane.b32.xlu0 %v1233, 32
    %v1237 = vpop.permute.xlu0 %1236
    %v1239 = vmul.f32 %v1232, %v1237
    %1241 = vrot.lane.b32.xlu0 %v1239, 32
    %v1242 = vpop.permute.xlu0 %1241
    %v1244 = vadd.f32 %v1234, %v1242
    %v1245 = vtanh.pop %v1244
    %1247 = vrot.lane.b32.xlu0 %v1245, 32
    %v1248 = vpop.permute.xlu0 %1247
    %v1250 = vmul.f32 %v1232, %v1248
    %1252 = vrot.lane.b32.xlu0 %v1250, 64
    %v1253 = vpop.permute.xlu0 %1252
    %1255 = vst.msk [vmem:[#allocation2 + $0xe] sm:$0x3] %vm204, %v1253
    %s1256 = scalar_lea.vmem [#allocation11], 2
    %1257 = vst.msk [vmem:[%s1256] sm:$0x3] %vm204, %v1253
    %1259 = vrot.lane.b32.xlu0 %v1244, 96
    %v1260 = vpop.permute.xlu0 %1259
    %s1262 = scalar_lea.vmem [#allocation13], 2
    %1263 = vst.msk [vmem:[%s1262] sm:$0x3] %vm204, %v1260
    %v1264 = vld [vmem:[#allocation2] sm:$0xff]
    %v1265 = vld [vmem:[#allocation2 + $0x8] sm:$0xff]
    %1266 = vst.msk [vmem:[#allocation10] sm:$0xff] %vm134, %v1264
    %1267 = vst.msk [vmem:[#allocation10 + $0x8] sm:$0xff] %vm134, %v1265
    // Predicated region
    $region50: #{tpu_custom_call.1} parent=1 // pred_check
      _
    $region51: #{tpu_custom_call.1} parent=1 // pred_check_branch
      %1269 = sbr.rel (0) target = $region53
    $region52: #{tpu_custom_call.1} parent=1 // pred_region
      %1271 = vsyncadd [#allocation6], 0
      %s1272 = sshll.u32 [#allocation10], 4
      %s1273 = int_to_ptr.vmem [resolvable:$true] %s1272
      %s1274 = sshll.u32 %s9, 4
      %s1275 = int_to_ptr.hbm [resolvable:$true] %s1274
      %1280 = dma.vmem_to_hbm [thread:$0]  %s1273, 256, %s1275, [#allocation6], 128, 128, 8
    $region53: #{tpu_custom_call.1} parent=1 // pred_fallthru
      _
    // Predicated region
    $region54: #{tpu_custom_call.1} parent=1 // pred_check
      _
    $region55: #{tpu_custom_call.1} parent=1 // pred_check_branch
      %1282 = sbr.rel (0) target = $region57
    $region56: #{tpu_custom_call.1} parent=1 // pred_region
      %1284 = vsyncadd [#allocation12], 0
      %s1285 = sshll.u32 [#allocation11], 4
      %s1286 = int_to_ptr.vmem [resolvable:$true] %s1285
      %s1287 = sshll.u32 %s10, 4
      %s1288 = int_to_ptr.hbm [resolvable:$true] %s1287
      %1293 = dma.vmem_to_hbm [thread:$0]  %s1286, 64, %s1288, [#allocation12], 32, 32, 2
    $region57: #{tpu_custom_call.1} parent=1 // pred_fallthru
      _
    // Predicated region
    $region58: #{tpu_custom_call.1} parent=1 // pred_check
      _
    $region59: #{tpu_custom_call.1} parent=1 // pred_check_branch
      %1295 = sbr.rel (0) target = $region61
    $region60: #{tpu_custom_call.1} parent=1 // pred_region
      %1297 = vsyncadd [#allocation12], 0
      %s1298 = sshll.u32 [#allocation13], 4
      %s1299 = int_to_ptr.vmem [resolvable:$true] %s1298
      %s1300 = sshll.u32 %s11, 4
      %s1301 = int_to_ptr.hbm [resolvable:$true] %s1300
      %1306 = dma.vmem_to_hbm [thread:$0]  %s1299, 64, %s1301, [#allocation12], 32, 32, 2
    $region61: #{tpu_custom_call.1} parent=1 // pred_fallthru
      _
    // Predicated region
    $region62: #{tpu_custom_call.1} parent=1 // pred_check
      _
    $region63: #{tpu_custom_call.1} parent=1 // pred_check_branch
      %1308 = sbr.rel (0) target = $region65
    $region64: #{tpu_custom_call.1} parent=1 // pred_region
      %1310 = dma.done [#allocation6], 256
    $region65: #{tpu_custom_call.1} parent=1 // pred_fallthru
      _
    // Predicated region
    $region66: #{tpu_custom_call.1} parent=1 // pred_check
      _
    $region67: #{tpu_custom_call.1} parent=1 // pred_check_branch
      %1312 = sbr.rel (0) target = $region69
    $region68: #{tpu_custom_call.1} parent=1 // pred_region
      %1314 = dma.done [#allocation12], 64
    $region69: #{tpu_custom_call.1} parent=1 // pred_fallthru
      _
    // Predicated region
    $region70: #{tpu_custom_call.1} parent=1 // pred_check
      _
    $region71: #{tpu_custom_call.1} parent=1 // pred_check_branch
      %1316 = sbr.rel (0) target = $region73
    $region72: #{tpu_custom_call.1} parent=1 // pred_region
      %1318 = dma.done [#allocation12], 64
    $region73: #{tpu_custom_call.1} parent=1 // pred_fallthru
      _
    %1319 = vsyncpa [#allocation5], 1
    %1320 = vsyncpa [#allocation8], 1
    %1321 = vsyncpa [#allocation6], 1
    %1322 = vsyncpa [#allocation12], 1

</llo_original>
